<compile_context>
chip_gen: v6e
topology: v6e:2x2x1
jax: 0.10.0
libtpu: 0.0.40
codegen_flags: <defaults>
</compile_context>

<pallas_src>
import jax
import jax.numpy as jnp
from jax import lax
from jax.experimental import pallas as pl
from jax.experimental.pallas import tpu as pltpu

# ----------------------------- mini-BERT config -----------------------------
VOCAB = 128
HIDDEN = 128
LAYERS = 2
HEADS = 4
HEAD_DIM = HIDDEN // HEADS          # 32
INTER = 256
MAX_POS = 16
SEQ = 8
BATCH = 2
N_CLASSES = 3
OUT_PAD = 128                        # lane-dense padded classifier output
LN_EPS = 1e-12                       # BERT default
SCALE = 1.0 / float(HEAD_DIM) ** 0.5


# ------------------------- fused encoder kernel ------------------------------
def _encoder_kernel(x_ref, mask_ref, embg_ref, embb_ref,
                    wqkv_ref, bqkv_ref, wo_ref, bo_ref, ln1g_ref, ln1b_ref,
                    w1_ref, b1_ref, w2_ref, b2_ref, ln2g_ref, ln2b_ref,
                    wp_ref, bp_ref, wout_ref, bout_ref,
                    o_ref, x_scratch):
    """Grid = (batch, layer). One batch element, one transformer layer per step.

    x_scratch (SEQ, HIDDEN) f32 holds the hidden state across layer steps.
    """
    l = pl.program_id(1)

    def layer_norm(y, g, b):                      # y: (S, H) f32, g/b: (1, H)
        mu = jnp.mean(y, axis=-1, keepdims=True)
        yc = y - mu
        var = jnp.mean(yc * yc, axis=-1, keepdims=True)
        return yc * lax.rsqrt(var + LN_EPS) * g + b

    # --- first layer step: embedding LayerNorm into the resident hidden state
    @pl.when(l == 0)
    def _():
        x_scratch[...] = layer_norm(x_ref[0], embg_ref[...], embb_ref[...])

    x = x_scratch[...]                            # (S, H) f32
    xb = x.astype(jnp.bfloat16)

    # --- fused QKV projection: one (H, 3H) matmul ---
    qkv = jnp.dot(xb, wqkv_ref[0], preferred_element_type=jnp.float32) + bqkv_ref[0]
    q = qkv[:, :HIDDEN]
    k = qkv[:, HIDDEN:2 * HIDDEN]
    v = qkv[:, 2 * HIDDEN:]
    mask = mask_ref[0]                            # (1, S) additive key-mask bias

    # --- attention: heads split logically, q/k/v stay lane-dense (S, 128) ---
    ctx_heads = []
    for h in range(HEADS):                        # static unroll, HEADS = 4
        sl = slice(h * HEAD_DIM, (h + 1) * HEAD_DIM)
        qh = q[:, sl].astype(jnp.bfloat16)        # (S, Dh)
        kh = k[:, sl].astype(jnp.bfloat16)
        vh = v[:, sl].astype(jnp.bfloat16)
        # contract on last dims -> no explicit transpose emitted
        s = lax.dot_general(qh, kh, (((1,), (1,)), ((), ())),
                            preferred_element_type=jnp.float32)  # (S, S)
        s = s * SCALE + mask
        s = s - jnp.max(s, axis=-1, keepdims=True)
        p = jnp.exp(s)
        p = p * pl.reciprocal(jnp.sum(p, axis=-1, keepdims=True), approx=True)
        ctx_heads.append(jnp.dot(p.astype(jnp.bfloat16), vh,
                                 preferred_element_type=jnp.float32))  # (S, Dh)
    ctx = jnp.concatenate(ctx_heads, axis=-1)     # (S, H), lane-dense

    attn_out = jnp.dot(ctx.astype(jnp.bfloat16), wo_ref[0],
                       preferred_element_type=jnp.float32) + bo_ref[0]
    x1 = layer_norm(attn_out + x, ln1g_ref[0], ln1b_ref[0])   # fused residual + LN

    # --- feed forward ---
    hmid = jnp.dot(x1.astype(jnp.bfloat16), w1_ref[0],
                   preferred_element_type=jnp.float32) + b1_ref[0]
    # tanh-approximate GELU (HF BERT uses erf-GELU; numerically very close)
    hmid = 0.5 * hmid * (1.0 + jnp.tanh(
        0.7978845608028654 * (hmid + 0.044715 * hmid * hmid * hmid)))
    ffn = jnp.dot(hmid.astype(jnp.bfloat16), w2_ref[0],
                  preferred_element_type=jnp.float32) + b2_ref[0]
    x2 = layer_norm(ffn + x1, ln2g_ref[0], ln2b_ref[0])       # fused residual + LN
    x_scratch[...] = x2

    # --- last layer step: fused pooler + (dropout=identity) + classifier ---
    @pl.when(l == pl.num_programs(1) - 1)
    def _():
        cls = x2[0:1, :]                                       # hidden[:, 0]
        pooled = jnp.tanh(jnp.dot(cls.astype(jnp.bfloat16), wp_ref[...],
                                  preferred_element_type=jnp.float32) + bp_ref[...])
        logits = jnp.dot(pooled.astype(jnp.bfloat16), wout_ref[...],
                         preferred_element_type=jnp.float32) + bout_ref[...]
        # lane-dense (S, 128) store; wrapper reads row 0 and slices N_CLASSES
        o_ref[0] = jnp.broadcast_to(logits, (SEQ, OUT_PAD))


# ------------------------------- parameters ---------------------------------
def init_params(key):
    ks = jax.random.split(key, 10)

    def nrm(k, shape):
        return 0.02 * jax.random.normal(k, shape, jnp.float32)

    z = lambda shape: jnp.zeros(shape, jnp.float32)
    o = lambda shape: jnp.ones(shape, jnp.float32)

    w_out = nrm(ks[8], (HIDDEN, N_CLASSES))
    b_out = z((N_CLASSES,))

    return {
        "word_emb": nrm(ks[0], (VOCAB, HIDDEN)),
        "pos_emb": nrm(ks[1], (MAX_POS, HIDDEN)),
        "type_emb": nrm(ks[2], (2, HIDDEN)),
        "emb_ln_g": o((1, HIDDEN)), "emb_ln_b": z((1, HIDDEN)),
        # per-layer weights stacked along a leading LAYERS axis
        "wqkv": nrm(ks[3], (LAYERS, HIDDEN, 3 * HIDDEN)).astype(jnp.bfloat16),
        "bqkv": z((LAYERS, 1, 3 * HIDDEN)),
        "wo": nrm(ks[4], (LAYERS, HIDDEN, HIDDEN)).astype(jnp.bfloat16),
        "bo": z((LAYERS, 1, HIDDEN)),
        "ln1_g": o((LAYERS, 1, HIDDEN)), "ln1_b": z((LAYERS, 1, HIDDEN)),
        "w1": nrm(ks[5], (LAYERS, HIDDEN, INTER)).astype(jnp.bfloat16),
        "b1": z((LAYERS, 1, INTER)),
        "w2": nrm(ks[6], (LAYERS, INTER, HIDDEN)).astype(jnp.bfloat16),
        "b2": z((LAYERS, 1, HIDDEN)),
        "ln2_g": o((LAYERS, 1, HIDDEN)), "ln2_b": z((LAYERS, 1, HIDDEN)),
        # pooler + classifier (classifier padded to 128 lanes)
        "wp": nrm(ks[7], (HIDDEN, HIDDEN)).astype(jnp.bfloat16),
        "bp": z((1, HIDDEN)),
        "w_out_pad": jnp.pad(w_out, ((0, 0), (0, OUT_PAD - N_CLASSES))
                             ).astype(jnp.bfloat16),
        "b_out_pad": jnp.pad(b_out, (0, OUT_PAD - N_CLASSES)).reshape(1, OUT_PAD),
    }


# --------------------------------- forward ----------------------------------
def bias_classifier_forward(params, input_ids, attention_mask):
    B, S = input_ids.shape
    H = HIDDEN

    # embeddings (gather is XLA glue; LayerNorm happens inside the kernel)
    x_emb = (jnp.take(params["word_emb"], input_ids, axis=0)
             + params["pos_emb"][None, :S, :]
             + params["type_emb"][0][None, None, :])            # (B, S, H) f32
    mask_bias = ((1.0 - attention_mask.astype(jnp.float32)) * -10000.0
                 ).reshape(B, 1, S)                              # BERT extended mask

    full2 = lambda b, l: (0, 0)          # constant small weights (fetched once)
    per_batch = lambda b, l: (b, 0, 0)   # batch-sliced activations / outputs
    per_layer = lambda b, l: (l, 0, 0)   # streamed, double-buffered layer weights

    in_specs = [
        pl.BlockSpec((1, S, H), per_batch),              # x_emb
        pl.BlockSpec((1, 1, S), per_batch),              # mask_bias
        pl.BlockSpec((1, H), full2),                     # emb_ln_g
        pl.BlockSpec((1, H), full2),                     # emb_ln_b
        pl.BlockSpec((1, H, 3 * H), per_layer),          # wqkv
        pl.BlockSpec((1, 1, 3 * H), per_layer),          # bqkv
        pl.BlockSpec((1, H, H), per_layer),              # wo
        pl.BlockSpec((1, 1, H), per_layer),              # bo
        pl.BlockSpec((1, 1, H), per_layer),              # ln1_g
        pl.BlockSpec((1, 1, H), per_layer),              # ln1_b
        pl.BlockSpec((1, H, INTER), per_layer),          # w1
        pl.BlockSpec((1, 1, INTER), per_layer),          # b1
        pl.BlockSpec((1, INTER, H), per_layer),          # w2
        pl.BlockSpec((1, 1, H), per_layer),              # b2
        pl.BlockSpec((1, 1, H), per_layer),              # ln2_g
        pl.BlockSpec((1, 1, H), per_layer),              # ln2_b
        pl.BlockSpec((H, H), full2),                     # wp
        pl.BlockSpec((1, H), full2),                     # bp
        pl.BlockSpec((H, OUT_PAD), full2),               # w_out (padded)
        pl.BlockSpec((1, OUT_PAD), full2),               # b_out (padded)
    ]

    out = pl.pallas_call(
        _encoder_kernel,
        grid=(B, LAYERS),
        in_specs=in_specs,
        out_specs=pl.BlockSpec((1, SEQ, OUT_PAD), per_batch),
        out_shape=jax.ShapeDtypeStruct((B, SEQ, OUT_PAD), jnp.float32),
        scratch_shapes=[pltpu.VMEM((SEQ, HIDDEN), jnp.float32)],
        compiler_params=pltpu.CompilerParams(
            dimension_semantics=("parallel", "arbitrary")),
    )(x_emb, mask_bias,
      params["emb_ln_g"], params["emb_ln_b"],
      params["wqkv"], params["bqkv"], params["wo"], params["bo"],
      params["ln1_g"], params["ln1_b"],
      params["w1"], params["b1"], params["w2"], params["b2"],
      params["ln2_g"], params["ln2_b"],
      params["wp"], params["bp"], params["w_out_pad"], params["b_out_pad"])

    return out[:, 0, :N_CLASSES]                          # (B, N_CLASSES)


# ----------------------------------- main ------------------------------------
if __name__ == "__main__":
    key = jax.random.PRNGKey(0)
    k_param, k_ids = jax.random.split(key)

    params = init_params(k_param)

    input_ids = jax.random.randint(k_ids, (BATCH, SEQ), 0, VOCAB, dtype=jnp.int32)
    attention_mask = jnp.ones((BATCH, SEQ), dtype=jnp.int32)
    attention_mask = attention_mask.at[1, SEQ - 2:].set(0)   # pad tail of example 1

    fwd = jax.jit(bias_classifier_forward)
    logits = jax.block_until_ready(fwd(params, input_ids, attention_mask))

    assert logits.shape == (BATCH, N_CLASSES)
    assert bool(jnp.all(jnp.isfinite(logits)))
    print("KERNEL_OK")
</pallas_src>

<mosaic_0001>
module attributes {stable_mosaic.version = 11 : i64} {
  func.func @_encoder_kernel(%arg0: i32, %arg1: i32, %arg2: memref<1x8x128xf32, #tpu.memory_space<vmem>>, %arg3: memref<1x1x8xf32, #tpu.memory_space<vmem>>, %arg4: memref<1x128xf32, #tpu.memory_space<vmem>>, %arg5: memref<1x128xf32, #tpu.memory_space<vmem>>, %arg6: memref<1x128x384xbf16, #tpu.memory_space<vmem>>, %arg7: memref<1x1x384xf32, #tpu.memory_space<vmem>>, %arg8: memref<1x128x128xbf16, #tpu.memory_space<vmem>>, %arg9: memref<1x1x128xf32, #tpu.memory_space<vmem>>, %arg10: memref<1x1x128xf32, #tpu.memory_space<vmem>>, %arg11: memref<1x1x128xf32, #tpu.memory_space<vmem>>, %arg12: memref<1x128x256xbf16, #tpu.memory_space<vmem>>, %arg13: memref<1x1x256xf32, #tpu.memory_space<vmem>>, %arg14: memref<1x256x128xbf16, #tpu.memory_space<vmem>>, %arg15: memref<1x1x128xf32, #tpu.memory_space<vmem>>, %arg16: memref<1x1x128xf32, #tpu.memory_space<vmem>>, %arg17: memref<1x1x128xf32, #tpu.memory_space<vmem>>, %arg18: memref<128x128xbf16, #tpu.memory_space<vmem>>, %arg19: memref<1x128xf32, #tpu.memory_space<vmem>>, %arg20: memref<128x128xbf16, #tpu.memory_space<vmem>>, %arg21: memref<1x128xf32, #tpu.memory_space<vmem>>, %arg22: memref<1x8x128xf32, #tpu.memory_space<vmem>>, %arg23: memref<8x128xf32, #tpu.memory_space<vmem>>) attributes {dimension_semantics = [#tpu.dimension_semantics<parallel>, #tpu.dimension_semantics<arbitrary>], iteration_bounds = array<i64: 2, 2>, scalar_prefetch = 0 : i64, scratch_operands = 1 : i64, tpu.core_type = #tpu.core_type<tc>, window_params = [{transform_indices = @transform_0, window_bounds = array<i64: 1, 8, 128>}, {transform_indices = @transform_1, window_bounds = array<i64: 1, 1, 8>}, {pipeline_mode = #tpu.pipeline_mode<synchronous>, transform_indices = @transform_2, window_bounds = array<i64: 1, 128>}, {pipeline_mode = #tpu.pipeline_mode<synchronous>, transform_indices = @transform_3, window_bounds = array<i64: 1, 128>}, {transform_indices = @transform_4, window_bounds = array<i64: 1, 128, 384>}, {transform_indices = @transform_5, window_bounds = array<i64: 1, 1, 384>}, {transform_indices = @transform_6, window_bounds = array<i64: 1, 128, 128>}, {transform_indices = @transform_7, window_bounds = array<i64: 1, 1, 128>}, {transform_indices = @transform_8, window_bounds = array<i64: 1, 1, 128>}, {transform_indices = @transform_9, window_bounds = array<i64: 1, 1, 128>}, {transform_indices = @transform_10, window_bounds = array<i64: 1, 128, 256>}, {transform_indices = @transform_11, window_bounds = array<i64: 1, 1, 256>}, {transform_indices = @transform_12, window_bounds = array<i64: 1, 256, 128>}, {transform_indices = @transform_13, window_bounds = array<i64: 1, 1, 128>}, {transform_indices = @transform_14, window_bounds = array<i64: 1, 1, 128>}, {transform_indices = @transform_15, window_bounds = array<i64: 1, 1, 128>}, {pipeline_mode = #tpu.pipeline_mode<synchronous>, transform_indices = @transform_16, window_bounds = array<i64: 128, 128>}, {pipeline_mode = #tpu.pipeline_mode<synchronous>, transform_indices = @transform_17, window_bounds = array<i64: 1, 128>}, {pipeline_mode = #tpu.pipeline_mode<synchronous>, transform_indices = @transform_18, window_bounds = array<i64: 128, 128>}, {pipeline_mode = #tpu.pipeline_mode<synchronous>, transform_indices = @transform_19, window_bounds = array<i64: 1, 128>}, {transform_indices = @transform_20, window_bounds = array<i64: 1, 8, 128>}]} {
    %c0_i32 = arith.constant 0 : i32
    %0 = arith.cmpi eq, %arg1, %c0_i32 : i32
    %1 = arith.extui %0 : i1 to i32
    %c0_i32_0 = arith.constant 0 : i32
    %2 = arith.cmpi ne, %1, %c0_i32_0 : i32
    scf.if %2 {
      %c0_81 = arith.constant 0 : index
      %c0_82 = arith.constant 0 : index
      %c0_83 = arith.constant 0 : index
      %201 = vector.load %arg2[%c0_81, %c0_82, %c0_83] : memref<1x8x128xf32, #tpu.memory_space<vmem>>, vector<1x8x128xf32>
      %202 = vector.shape_cast %201 : vector<1x8x128xf32> to vector<8x128xf32>
      %c0_84 = arith.constant 0 : index
      %c0_85 = arith.constant 0 : index
      %203 = vector.load %arg4[%c0_84, %c0_85] : memref<1x128xf32, #tpu.memory_space<vmem>>, vector<1x128xf32>
      %c0_86 = arith.constant 0 : index
      %c0_87 = arith.constant 0 : index
      %204 = vector.load %arg5[%c0_86, %c0_87] : memref<1x128xf32, #tpu.memory_space<vmem>>, vector<1x128xf32>
      %cst_88 = arith.constant dense<0.000000e+00> : vector<8xf32>
      %205 = vector.multi_reduction <add>, %202, %cst_88 [1] : vector<8x128xf32> to vector<8xf32>
      %206 = vector.shape_cast %205 : vector<8xf32> to vector<8x1xf32>
      %cst_89 = arith.constant 1.280000e+02 : f32
      %207 = vector.broadcast %cst_89 : f32 to vector<8x1xf32>
      %208 = arith.divf %206, %207 : vector<8x1xf32>
      %209 = vector.broadcast %208 : vector<8x1xf32> to vector<8x128xf32>
      %210 = arith.subf %202, %209 : vector<8x128xf32>
      %211 = arith.mulf %210, %210 : vector<8x128xf32>
      %cst_90 = arith.constant dense<0.000000e+00> : vector<8xf32>
      %212 = vector.multi_reduction <add>, %211, %cst_90 [1] : vector<8x128xf32> to vector<8xf32>
      %213 = vector.shape_cast %212 : vector<8xf32> to vector<8x1xf32>
      %cst_91 = arith.constant 1.280000e+02 : f32
      %214 = vector.broadcast %cst_91 : f32 to vector<8x1xf32>
      %215 = arith.divf %213, %214 : vector<8x1xf32>
      %cst_92 = arith.constant 9.99999996E-13 : f32
      %216 = vector.broadcast %cst_92 : f32 to vector<8x1xf32>
      %217 = arith.addf %215, %216 : vector<8x1xf32>
      %218 = math.rsqrt %217 : vector<8x1xf32>
      %219 = vector.broadcast %218 : vector<8x1xf32> to vector<8x128xf32>
      %220 = arith.mulf %210, %219 : vector<8x128xf32>
      %221 = vector.broadcast %203 : vector<1x128xf32> to vector<8x128xf32>
      %222 = arith.mulf %220, %221 : vector<8x128xf32>
      %223 = vector.broadcast %204 : vector<1x128xf32> to vector<8x128xf32>
      %224 = arith.addf %222, %223 : vector<8x128xf32>
      %c0_93 = arith.constant 0 : index
      %c0_94 = arith.constant 0 : index
      %225 = vector.load %arg23[%c0_93, %c0_94] : memref<8x128xf32, #tpu.memory_space<vmem>>, vector<8x128xf32>
      tpu.vector_store %arg23[%c0_93, %c0_94], %224 {strides = array<i32>} : memref<8x128xf32, #tpu.memory_space<vmem>>, vector<8x128xf32>,
    } else {
    }
    %c0 = arith.constant 0 : index
    %c0_1 = arith.constant 0 : index
    %3 = vector.load %arg23[%c0, %c0_1] : memref<8x128xf32, #tpu.memory_space<vmem>>, vector<8x128xf32>
    %4 = arith.truncf %3 : vector<8x128xf32> to vector<8x128xbf16>
    %c0_2 = arith.constant 0 : index
    %c0_3 = arith.constant 0 : index
    %c0_4 = arith.constant 0 : index
    %5 = vector.load %arg6[%c0_2, %c0_3, %c0_4] : memref<1x128x384xbf16, #tpu.memory_space<vmem>>, vector<1x128x384xbf16>
    %6 = vector.shape_cast %5 : vector<1x128x384xbf16> to vector<128x384xbf16>
    %cst = arith.constant dense<0.000000e+00> : vector<8x384xf32>
    %7 = tpu.matmul %4, %6, %cst {dimension_numbers = #tpu.dot_dimension_numbers<[1], [0], [0], [1], [0, 0, 1, 1], [], []>} : vector<8x128xbf16>, vector<128x384xbf16>, vector<8x384xf32> -> vector<8x384xf32>
    %c0_5 = arith.constant 0 : index
    %c0_6 = arith.constant 0 : index
    %c0_7 = arith.constant 0 : index
    %8 = vector.load %arg7[%c0_5, %c0_6, %c0_7] : memref<1x1x384xf32, #tpu.memory_space<vmem>>, vector<1x1x384xf32>
    %9 = vector.shape_cast %8 : vector<1x1x384xf32> to vector<1x384xf32>
    %10 = vector.broadcast %9 : vector<1x384xf32> to vector<8x384xf32>
    %11 = arith.addf %7, %10 : vector<8x384xf32>
    %12 = vector.extract_strided_slice %11 {offsets = [0, 0], sizes = [8, 128], strides = [1, 1]} : vector<8x384xf32> to vector<8x128xf32>
    %13 = vector.extract_strided_slice %11 {offsets = [0, 128], sizes = [8, 128], strides = [1, 1]} : vector<8x384xf32> to vector<8x128xf32>
    %14 = vector.extract_strided_slice %11 {offsets = [0, 256], sizes = [8, 128], strides = [1, 1]} : vector<8x384xf32> to vector<8x128xf32>
    %c0_8 = arith.constant 0 : index
    %c0_9 = arith.constant 0 : index
    %c0_10 = arith.constant 0 : index
    %15 = vector.load %arg3[%c0_8, %c0_9, %c0_10] : memref<1x1x8xf32, #tpu.memory_space<vmem>>, vector<1x1x8xf32>
    %16 = vector.shape_cast %15 : vector<1x1x8xf32> to vector<1x8xf32>
    %17 = vector.extract_strided_slice %12 {offsets = [0, 0], sizes = [8, 32], strides = [1, 1]} : vector<8x128xf32> to vector<8x32xf32>
    %18 = arith.truncf %17 : vector<8x32xf32> to vector<8x32xbf16>
    %19 = vector.extract_strided_slice %13 {offsets = [0, 0], sizes = [8, 32], strides = [1, 1]} : vector<8x128xf32> to vector<8x32xf32>
    %20 = arith.truncf %19 : vector<8x32xf32> to vector<8x32xbf16>
    %21 = vector.extract_strided_slice %14 {offsets = [0, 0], sizes = [8, 32], strides = [1, 1]} : vector<8x128xf32> to vector<8x32xf32>
    %22 = arith.truncf %21 : vector<8x32xf32> to vector<8x32xbf16>
    %cst_11 = arith.constant dense<0.000000e+00> : vector<8x8xf32>
    %23 = tpu.matmul %18, %20, %cst_11 {dimension_numbers = #tpu.dot_dimension_numbers<[1], [1], [0], [0], [0, 0, 1, 0], [], []>} : vector<8x32xbf16>, vector<8x32xbf16>, vector<8x8xf32> -> vector<8x8xf32>
    %cst_12 = arith.constant 0.176776692 : f32
    %24 = vector.broadcast %cst_12 : f32 to vector<8x8xf32>
    %25 = arith.mulf %23, %24 : vector<8x8xf32>
    %26 = vector.broadcast %16 : vector<1x8xf32> to vector<8x8xf32>
    %27 = arith.addf %25, %26 : vector<8x8xf32>
    %cst_13 = arith.constant dense<0xFF800000> : vector<8xf32>
    %28 = vector.multi_reduction <maximumf>, %27, %cst_13 [1] : vector<8x8xf32> to vector<8xf32>
    %29 = vector.shape_cast %28 : vector<8xf32> to vector<8x1xf32>
    %30 = vector.broadcast %29 : vector<8x1xf32> to vector<8x8xf32>
    %31 = arith.subf %27, %30 : vector<8x8xf32>
    %32 = math.exp %31 : vector<8x8xf32>
    %cst_14 = arith.constant dense<0.000000e+00> : vector<8xf32>
    %33 = vector.multi_reduction <add>, %32, %cst_14 [1] : vector<8x8xf32> to vector<8xf32>
    %34 = vector.shape_cast %33 : vector<8xf32> to vector<8x1xf32>
    %35 = tpu.reciprocal %34 {approx = true} : vector<8x1xf32> -> vector<8x1xf32>
    %36 = vector.broadcast %35 : vector<8x1xf32> to vector<8x8xf32>
    %37 = arith.mulf %32, %36 : vector<8x8xf32>
    %38 = arith.truncf %37 : vector<8x8xf32> to vector<8x8xbf16>
    %cst_15 = arith.constant dense<0.000000e+00> : vector<8x32xf32>
    %39 = tpu.matmul %38, %22, %cst_15 {dimension_numbers = #tpu.dot_dimension_numbers<[1], [0], [0], [1], [0, 0, 1, 1], [], []>} : vector<8x8xbf16>, vector<8x32xbf16>, vector<8x32xf32> -> vector<8x32xf32>
    %40 = vector.extract_strided_slice %12 {offsets = [0, 32], sizes = [8, 32], strides = [1, 1]} : vector<8x128xf32> to vector<8x32xf32>
    %41 = arith.truncf %40 : vector<8x32xf32> to vector<8x32xbf16>
    %42 = vector.extract_strided_slice %13 {offsets = [0, 32], sizes = [8, 32], strides = [1, 1]} : vector<8x128xf32> to vector<8x32xf32>
    %43 = arith.truncf %42 : vector<8x32xf32> to vector<8x32xbf16>
    %44 = vector.extract_strided_slice %14 {offsets = [0, 32], sizes = [8, 32], strides = [1, 1]} : vector<8x128xf32> to vector<8x32xf32>
    %45 = arith.truncf %44 : vector<8x32xf32> to vector<8x32xbf16>
    %cst_16 = arith.constant dense<0.000000e+00> : vector<8x8xf32>
    %46 = tpu.matmul %41, %43, %cst_16 {dimension_numbers = #tpu.dot_dimension_numbers<[1], [1], [0], [0], [0, 0, 1, 0], [], []>} : vector<8x32xbf16>, vector<8x32xbf16>, vector<8x8xf32> -> vector<8x8xf32>
    %cst_17 = arith.constant 0.176776692 : f32
    %47 = vector.broadcast %cst_17 : f32 to vector<8x8xf32>
    %48 = arith.mulf %46, %47 : vector<8x8xf32>
    %49 = vector.broadcast %16 : vector<1x8xf32> to vector<8x8xf32>
    %50 = arith.addf %48, %49 : vector<8x8xf32>
    %cst_18 = arith.constant dense<0xFF800000> : vector<8xf32>
    %51 = vector.multi_reduction <maximumf>, %50, %cst_18 [1] : vector<8x8xf32> to vector<8xf32>
    %52 = vector.shape_cast %51 : vector<8xf32> to vector<8x1xf32>
    %53 = vector.broadcast %52 : vector<8x1xf32> to vector<8x8xf32>
    %54 = arith.subf %50, %53 : vector<8x8xf32>
    %55 = math.exp %54 : vector<8x8xf32>
    %cst_19 = arith.constant dense<0.000000e+00> : vector<8xf32>
    %56 = vector.multi_reduction <add>, %55, %cst_19 [1] : vector<8x8xf32> to vector<8xf32>
    %57 = vector.shape_cast %56 : vector<8xf32> to vector<8x1xf32>
    %58 = tpu.reciprocal %57 {approx = true} : vector<8x1xf32> -> vector<8x1xf32>
    %59 = vector.broadcast %58 : vector<8x1xf32> to vector<8x8xf32>
    %60 = arith.mulf %55, %59 : vector<8x8xf32>
    %61 = arith.truncf %60 : vector<8x8xf32> to vector<8x8xbf16>
    %cst_20 = arith.constant dense<0.000000e+00> : vector<8x32xf32>
    %62 = tpu.matmul %61, %45, %cst_20 {dimension_numbers = #tpu.dot_dimension_numbers<[1], [0], [0], [1], [0, 0, 1, 1], [], []>} : vector<8x8xbf16>, vector<8x32xbf16>, vector<8x32xf32> -> vector<8x32xf32>
    %63 = vector.extract_strided_slice %12 {offsets = [0, 64], sizes = [8, 32], strides = [1, 1]} : vector<8x128xf32> to vector<8x32xf32>
    %64 = arith.truncf %63 : vector<8x32xf32> to vector<8x32xbf16>
    %65 = vector.extract_strided_slice %13 {offsets = [0, 64], sizes = [8, 32], strides = [1, 1]} : vector<8x128xf32> to vector<8x32xf32>
    %66 = arith.truncf %65 : vector<8x32xf32> to vector<8x32xbf16>
    %67 = vector.extract_strided_slice %14 {offsets = [0, 64], sizes = [8, 32], strides = [1, 1]} : vector<8x128xf32> to vector<8x32xf32>
    %68 = arith.truncf %67 : vector<8x32xf32> to vector<8x32xbf16>
    %cst_21 = arith.constant dense<0.000000e+00> : vector<8x8xf32>
    %69 = tpu.matmul %64, %66, %cst_21 {dimension_numbers = #tpu.dot_dimension_numbers<[1], [1], [0], [0], [0, 0, 1, 0], [], []>} : vector<8x32xbf16>, vector<8x32xbf16>, vector<8x8xf32> -> vector<8x8xf32>
    %cst_22 = arith.constant 0.176776692 : f32
    %70 = vector.broadcast %cst_22 : f32 to vector<8x8xf32>
    %71 = arith.mulf %69, %70 : vector<8x8xf32>
    %72 = vector.broadcast %16 : vector<1x8xf32> to vector<8x8xf32>
    %73 = arith.addf %71, %72 : vector<8x8xf32>
    %cst_23 = arith.constant dense<0xFF800000> : vector<8xf32>
    %74 = vector.multi_reduction <maximumf>, %73, %cst_23 [1] : vector<8x8xf32> to vector<8xf32>
    %75 = vector.shape_cast %74 : vector<8xf32> to vector<8x1xf32>
    %76 = vector.broadcast %75 : vector<8x1xf32> to vector<8x8xf32>
    %77 = arith.subf %73, %76 : vector<8x8xf32>
    %78 = math.exp %77 : vector<8x8xf32>
    %cst_24 = arith.constant dense<0.000000e+00> : vector<8xf32>
    %79 = vector.multi_reduction <add>, %78, %cst_24 [1] : vector<8x8xf32> to vector<8xf32>
    %80 = vector.shape_cast %79 : vector<8xf32> to vector<8x1xf32>
    %81 = tpu.reciprocal %80 {approx = true} : vector<8x1xf32> -> vector<8x1xf32>
    %82 = vector.broadcast %81 : vector<8x1xf32> to vector<8x8xf32>
    %83 = arith.mulf %78, %82 : vector<8x8xf32>
    %84 = arith.truncf %83 : vector<8x8xf32> to vector<8x8xbf16>
    %cst_25 = arith.constant dense<0.000000e+00> : vector<8x32xf32>
    %85 = tpu.matmul %84, %68, %cst_25 {dimension_numbers = #tpu.dot_dimension_numbers<[1], [0], [0], [1], [0, 0, 1, 1], [], []>} : vector<8x8xbf16>, vector<8x32xbf16>, vector<8x32xf32> -> vector<8x32xf32>
    %86 = vector.extract_strided_slice %12 {offsets = [0, 96], sizes = [8, 32], strides = [1, 1]} : vector<8x128xf32> to vector<8x32xf32>
    %87 = arith.truncf %86 : vector<8x32xf32> to vector<8x32xbf16>
    %88 = vector.extract_strided_slice %13 {offsets = [0, 96], sizes = [8, 32], strides = [1, 1]} : vector<8x128xf32> to vector<8x32xf32>
    %89 = arith.truncf %88 : vector<8x32xf32> to vector<8x32xbf16>
    %90 = vector.extract_strided_slice %14 {offsets = [0, 96], sizes = [8, 32], strides = [1, 1]} : vector<8x128xf32> to vector<8x32xf32>
    %91 = arith.truncf %90 : vector<8x32xf32> to vector<8x32xbf16>
    %cst_26 = arith.constant dense<0.000000e+00> : vector<8x8xf32>
    %92 = tpu.matmul %87, %89, %cst_26 {dimension_numbers = #tpu.dot_dimension_numbers<[1], [1], [0], [0], [0, 0, 1, 0], [], []>} : vector<8x32xbf16>, vector<8x32xbf16>, vector<8x8xf32> -> vector<8x8xf32>
    %cst_27 = arith.constant 0.176776692 : f32
    %93 = vector.broadcast %cst_27 : f32 to vector<8x8xf32>
    %94 = arith.mulf %92, %93 : vector<8x8xf32>
    %95 = vector.broadcast %16 : vector<1x8xf32> to vector<8x8xf32>
    %96 = arith.addf %94, %95 : vector<8x8xf32>
    %cst_28 = arith.constant dense<0xFF800000> : vector<8xf32>
    %97 = vector.multi_reduction <maximumf>, %96, %cst_28 [1] : vector<8x8xf32> to vector<8xf32>
    %98 = vector.shape_cast %97 : vector<8xf32> to vector<8x1xf32>
    %99 = vector.broadcast %98 : vector<8x1xf32> to vector<8x8xf32>
    %100 = arith.subf %96, %99 : vector<8x8xf32>
    %101 = math.exp %100 : vector<8x8xf32>
    %cst_29 = arith.constant dense<0.000000e+00> : vector<8xf32>
    %102 = vector.multi_reduction <add>, %101, %cst_29 [1] : vector<8x8xf32> to vector<8xf32>
    %103 = vector.shape_cast %102 : vector<8xf32> to vector<8x1xf32>
    %104 = tpu.reciprocal %103 {approx = true} : vector<8x1xf32> -> vector<8x1xf32>
    %105 = vector.broadcast %104 : vector<8x1xf32> to vector<8x8xf32>
    %106 = arith.mulf %101, %105 : vector<8x8xf32>
    %107 = arith.truncf %106 : vector<8x8xf32> to vector<8x8xbf16>
    %cst_30 = arith.constant dense<0.000000e+00> : vector<8x32xf32>
    %108 = tpu.matmul %107, %91, %cst_30 {dimension_numbers = #tpu.dot_dimension_numbers<[1], [0], [0], [1], [0, 0, 1, 1], [], []>} : vector<8x8xbf16>, vector<8x32xbf16>, vector<8x32xf32> -> vector<8x32xf32>
    %109 = tpu.concatenate %39, %62, %85, %108 in 1 : vector<8x32xf32>, vector<8x32xf32>, vector<8x32xf32>, vector<8x32xf32> -> vector<8x128xf32>
    %110 = arith.truncf %109 : vector<8x128xf32> to vector<8x128xbf16>
    %c0_31 = arith.constant 0 : index
    %c0_32 = arith.constant 0 : index
    %c0_33 = arith.constant 0 : index
    %111 = vector.load %arg8[%c0_31, %c0_32, %c0_33] : memref<1x128x128xbf16, #tpu.memory_space<vmem>>, vector<1x128x128xbf16>
    %112 = vector.shape_cast %111 : vector<1x128x128xbf16> to vector<128x128xbf16>
    %cst_34 = arith.constant dense<0.000000e+00> : vector<8x128xf32>
    %113 = tpu.matmul %110, %112, %cst_34 {dimension_numbers = #tpu.dot_dimension_numbers<[1], [0], [0], [1], [0, 0, 1, 1], [], []>} : vector<8x128xbf16>, vector<128x128xbf16>, vector<8x128xf32> -> vector<8x128xf32>
    %c0_35 = arith.constant 0 : index
    %c0_36 = arith.constant 0 : index
    %c0_37 = arith.constant 0 : index
    %114 = vector.load %arg9[%c0_35, %c0_36, %c0_37] : memref<1x1x128xf32, #tpu.memory_space<vmem>>, vector<1x1x128xf32>
    %115 = vector.shape_cast %114 : vector<1x1x128xf32> to vector<1x128xf32>
    %116 = vector.broadcast %115 : vector<1x128xf32> to vector<8x128xf32>
    %117 = arith.addf %113, %116 : vector<8x128xf32>
    %118 = arith.addf %117, %3 : vector<8x128xf32>
    %c0_38 = arith.constant 0 : index
    %c0_39 = arith.constant 0 : index
    %c0_40 = arith.constant 0 : index
    %119 = vector.load %arg10[%c0_38, %c0_39, %c0_40] : memref<1x1x128xf32, #tpu.memory_space<vmem>>, vector<1x1x128xf32>
    %120 = vector.shape_cast %119 : vector<1x1x128xf32> to vector<1x128xf32>
    %c0_41 = arith.constant 0 : index
    %c0_42 = arith.constant 0 : index
    %c0_43 = arith.constant 0 : index
    %121 = vector.load %arg11[%c0_41, %c0_42, %c0_43] : memref<1x1x128xf32, #tpu.memory_space<vmem>>, vector<1x1x128xf32>
    %122 = vector.shape_cast %121 : vector<1x1x128xf32> to vector<1x128xf32>
    %cst_44 = arith.constant dense<0.000000e+00> : vector<8xf32>
    %123 = vector.multi_reduction <add>, %118, %cst_44 [1] : vector<8x128xf32> to vector<8xf32>
    %124 = vector.shape_cast %123 : vector<8xf32> to vector<8x1xf32>
    %cst_45 = arith.constant 1.280000e+02 : f32
    %125 = vector.broadcast %cst_45 : f32 to vector<8x1xf32>
    %126 = arith.divf %124, %125 : vector<8x1xf32>
    %127 = vector.broadcast %126 : vector<8x1xf32> to vector<8x128xf32>
    %128 = arith.subf %118, %127 : vector<8x128xf32>
    %129 = arith.mulf %128, %128 : vector<8x128xf32>
    %cst_46 = arith.constant dense<0.000000e+00> : vector<8xf32>
    %130 = vector.multi_reduction <add>, %129, %cst_46 [1] : vector<8x128xf32> to vector<8xf32>
    %131 = vector.shape_cast %130 : vector<8xf32> to vector<8x1xf32>
    %cst_47 = arith.constant 1.280000e+02 : f32
    %132 = vector.broadcast %cst_47 : f32 to vector<8x1xf32>
    %133 = arith.divf %131, %132 : vector<8x1xf32>
    %cst_48 = arith.constant 9.99999996E-13 : f32
    %134 = vector.broadcast %cst_48 : f32 to vector<8x1xf32>
    %135 = arith.addf %133, %134 : vector<8x1xf32>
    %136 = math.rsqrt %135 : vector<8x1xf32>
    %137 = vector.broadcast %136 : vector<8x1xf32> to vector<8x128xf32>
    %138 = arith.mulf %128, %137 : vector<8x128xf32>
    %139 = vector.broadcast %120 : vector<1x128xf32> to vector<8x128xf32>
    %140 = arith.mulf %138, %139 : vector<8x128xf32>
    %141 = vector.broadcast %122 : vector<1x128xf32> to vector<8x128xf32>
    %142 = arith.addf %140, %141 : vector<8x128xf32>
    %143 = arith.truncf %142 : vector<8x128xf32> to vector<8x128xbf16>
    %c0_49 = arith.constant 0 : index
    %c0_50 = arith.constant 0 : index
    %c0_51 = arith.constant 0 : index
    %144 = vector.load %arg12[%c0_49, %c0_50, %c0_51] : memref<1x128x256xbf16, #tpu.memory_space<vmem>>, vector<1x128x256xbf16>
    %145 = vector.shape_cast %144 : vector<1x128x256xbf16> to vector<128x256xbf16>
    %cst_52 = arith.constant dense<0.000000e+00> : vector<8x256xf32>
    %146 = tpu.matmul %143, %145, %cst_52 {dimension_numbers = #tpu.dot_dimension_numbers<[1], [0], [0], [1], [0, 0, 1, 1], [], []>} : vector<8x128xbf16>, vector<128x256xbf16>, vector<8x256xf32> -> vector<8x256xf32>
    %c0_53 = arith.constant 0 : index
    %c0_54 = arith.constant 0 : index
    %c0_55 = arith.constant 0 : index
    %147 = vector.load %arg13[%c0_53, %c0_54, %c0_55] : memref<1x1x256xf32, #tpu.memory_space<vmem>>, vector<1x1x256xf32>
    %148 = vector.shape_cast %147 : vector<1x1x256xf32> to vector<1x256xf32>
    %149 = vector.broadcast %148 : vector<1x256xf32> to vector<8x256xf32>
    %150 = arith.addf %146, %149 : vector<8x256xf32>
    %cst_56 = arith.constant 5.000000e-01 : f32
    %151 = vector.broadcast %cst_56 : f32 to vector<8x256xf32>
    %152 = arith.mulf %151, %150 : vector<8x256xf32>
    %cst_57 = arith.constant 4.471500e-02 : f32
    %153 = vector.broadcast %cst_57 : f32 to vector<8x256xf32>
    %154 = arith.mulf %153, %150 : vector<8x256xf32>
    %155 = arith.mulf %154, %150 : vector<8x256xf32>
    %156 = arith.mulf %155, %150 : vector<8x256xf32>
    %157 = arith.addf %150, %156 : vector<8x256xf32>
    %cst_58 = arith.constant 0.797884583 : f32
    %158 = vector.broadcast %cst_58 : f32 to vector<8x256xf32>
    %159 = arith.mulf %158, %157 : vector<8x256xf32>
    %160 = math.tanh %159 : vector<8x256xf32>
    %cst_59 = arith.constant 1.000000e+00 : f32
    %161 = vector.broadcast %cst_59 : f32 to vector<8x256xf32>
    %162 = arith.addf %161, %160 : vector<8x256xf32>
    %163 = arith.mulf %152, %162 : vector<8x256xf32>
    %164 = arith.truncf %163 : vector<8x256xf32> to vector<8x256xbf16>
    %c0_60 = arith.constant 0 : index
    %c0_61 = arith.constant 0 : index
    %c0_62 = arith.constant 0 : index
    %165 = vector.load %arg14[%c0_60, %c0_61, %c0_62] : memref<1x256x128xbf16, #tpu.memory_space<vmem>>, vector<1x256x128xbf16>
    %166 = vector.shape_cast %165 : vector<1x256x128xbf16> to vector<256x128xbf16>
    %cst_63 = arith.constant dense<0.000000e+00> : vector<8x128xf32>
    %167 = tpu.matmul %164, %166, %cst_63 {dimension_numbers = #tpu.dot_dimension_numbers<[1], [0], [0], [1], [0, 0, 1, 1], [], []>} : vector<8x256xbf16>, vector<256x128xbf16>, vector<8x128xf32> -> vector<8x128xf32>
    %c0_64 = arith.constant 0 : index
    %c0_65 = arith.constant 0 : index
    %c0_66 = arith.constant 0 : index
    %168 = vector.load %arg15[%c0_64, %c0_65, %c0_66] : memref<1x1x128xf32, #tpu.memory_space<vmem>>, vector<1x1x128xf32>
    %169 = vector.shape_cast %168 : vector<1x1x128xf32> to vector<1x128xf32>
    %170 = vector.broadcast %169 : vector<1x128xf32> to vector<8x128xf32>
    %171 = arith.addf %167, %170 : vector<8x128xf32>
    %172 = arith.addf %171, %142 : vector<8x128xf32>
    %c0_67 = arith.constant 0 : index
    %c0_68 = arith.constant 0 : index
    %c0_69 = arith.constant 0 : index
    %173 = vector.load %arg16[%c0_67, %c0_68, %c0_69] : memref<1x1x128xf32, #tpu.memory_space<vmem>>, vector<1x1x128xf32>
    %174 = vector.shape_cast %173 : vector<1x1x128xf32> to vector<1x128xf32>
    %c0_70 = arith.constant 0 : index
    %c0_71 = arith.constant 0 : index
    %c0_72 = arith.constant 0 : index
    %175 = vector.load %arg17[%c0_70, %c0_71, %c0_72] : memref<1x1x128xf32, #tpu.memory_space<vmem>>, vector<1x1x128xf32>
    %176 = vector.shape_cast %175 : vector<1x1x128xf32> to vector<1x128xf32>
    %cst_73 = arith.constant dense<0.000000e+00> : vector<8xf32>
    %177 = vector.multi_reduction <add>, %172, %cst_73 [1] : vector<8x128xf32> to vector<8xf32>
    %178 = vector.shape_cast %177 : vector<8xf32> to vector<8x1xf32>
    %cst_74 = arith.constant 1.280000e+02 : f32
    %179 = vector.broadcast %cst_74 : f32 to vector<8x1xf32>
    %180 = arith.divf %178, %179 : vector<8x1xf32>
    %181 = vector.broadcast %180 : vector<8x1xf32> to vector<8x128xf32>
    %182 = arith.subf %172, %181 : vector<8x128xf32>
    %183 = arith.mulf %182, %182 : vector<8x128xf32>
    %cst_75 = arith.constant dense<0.000000e+00> : vector<8xf32>
    %184 = vector.multi_reduction <add>, %183, %cst_75 [1] : vector<8x128xf32> to vector<8xf32>
    %185 = vector.shape_cast %184 : vector<8xf32> to vector<8x1xf32>
    %cst_76 = arith.constant 1.280000e+02 : f32
    %186 = vector.broadcast %cst_76 : f32 to vector<8x1xf32>
    %187 = arith.divf %185, %186 : vector<8x1xf32>
    %cst_77 = arith.constant 9.99999996E-13 : f32
    %188 = vector.broadcast %cst_77 : f32 to vector<8x1xf32>
    %189 = arith.addf %187, %188 : vector<8x1xf32>
    %190 = math.rsqrt %189 : vector<8x1xf32>
    %191 = vector.broadcast %190 : vector<8x1xf32> to vector<8x128xf32>
    %192 = arith.mulf %182, %191 : vector<8x128xf32>
    %193 = vector.broadcast %174 : vector<1x128xf32> to vector<8x128xf32>
    %194 = arith.mulf %192, %193 : vector<8x128xf32>
    %195 = vector.broadcast %176 : vector<1x128xf32> to vector<8x128xf32>
    %196 = arith.addf %194, %195 : vector<8x128xf32>
    %c0_78 = arith.constant 0 : index
    %c0_79 = arith.constant 0 : index
    %197 = vector.load %arg23[%c0_78, %c0_79] : memref<8x128xf32, #tpu.memory_space<vmem>>, vector<8x128xf32>
    tpu.vector_store %arg23[%c0_78, %c0_79], %196 {strides = array<i32>} : memref<8x128xf32, #tpu.memory_space<vmem>>, vector<8x128xf32>,
    %c1_i32 = arith.constant 1 : i32
    %198 = arith.cmpi eq, %arg1, %c1_i32 : i32
    %199 = arith.extui %198 : i1 to i32
    %c0_i32_80 = arith.constant 0 : i32
    %200 = arith.cmpi ne, %199, %c0_i32_80 : i32
    scf.if %200 {
      %201 = vector.extract_strided_slice %196 {offsets = [0, 0], sizes = [1, 128], strides = [1, 1]} : vector<8x128xf32> to vector<1x128xf32>
      %202 = arith.truncf %201 : vector<1x128xf32> to vector<1x128xbf16>
      %c0_81 = arith.constant 0 : index
      %c0_82 = arith.constant 0 : index
      %203 = vector.load %arg18[%c0_81, %c0_82] : memref<128x128xbf16, #tpu.memory_space<vmem>>, vector<128x128xbf16>
      %cst_83 = arith.constant dense<0.000000e+00> : vector<1x128xf32>
      %204 = tpu.matmul %202, %203, %cst_83 {dimension_numbers = #tpu.dot_dimension_numbers<[1], [0], [0], [1], [0, 0, 1, 1], [], []>} : vector<1x128xbf16>, vector<128x128xbf16>, vector<1x128xf32> -> vector<1x128xf32>
      %c0_84 = arith.constant 0 : index
      %c0_85 = arith.constant 0 : index
      %205 = vector.load %arg19[%c0_84, %c0_85] : memref<1x128xf32, #tpu.memory_space<vmem>>, vector<1x128xf32>
      %206 = arith.addf %204, %205 : vector<1x128xf32>
      %207 = math.tanh %206 : vector<1x128xf32>
      %208 = arith.truncf %207 : vector<1x128xf32> to vector<1x128xbf16>
      %c0_86 = arith.constant 0 : index
      %c0_87 = arith.constant 0 : index
      %209 = vector.load %arg20[%c0_86, %c0_87] : memref<128x128xbf16, #tpu.memory_space<vmem>>, vector<128x128xbf16>
      %cst_88 = arith.constant dense<0.000000e+00> : vector<1x128xf32>
      %210 = tpu.matmul %208, %209, %cst_88 {dimension_numbers = #tpu.dot_dimension_numbers<[1], [0], [0], [1], [0, 0, 1, 1], [], []>} : vector<1x128xbf16>, vector<128x128xbf16>, vector<1x128xf32> -> vector<1x128xf32>
      %c0_89 = arith.constant 0 : index
      %c0_90 = arith.constant 0 : index
      %211 = vector.load %arg21[%c0_89, %c0_90] : memref<1x128xf32, #tpu.memory_space<vmem>>, vector<1x128xf32>
      %212 = arith.addf %210, %211 : vector<1x128xf32>
      %213 = vector.shape_cast %212 : vector<1x128xf32> to vector<1x128xf32>
      %214 = vector.broadcast %213 : vector<1x128xf32> to vector<8x128xf32>
      %c0_91 = arith.constant 0 : index
      %c0_92 = arith.constant 0 : index
      %c0_93 = arith.constant 0 : index
      %215 = vector.load %arg22[%c0_91, %c0_92, %c0_93] : memref<1x8x128xf32, #tpu.memory_space<vmem>>, vector<1x8x128xf32>
      %216 = vector.shape_cast %215 : vector<1x8x128xf32> to vector<8x128xf32>
      %217 = vector.shape_cast %214 : vector<8x128xf32> to vector<1x8x128xf32>
      tpu.vector_store %arg22[%c0_91, %c0_92, %c0_93], %217 {strides = array<i32>} : memref<1x8x128xf32, #tpu.memory_space<vmem>>, vector<1x8x128xf32>,
    } else {
    }
    return
  }
  func.func @transform_0(%arg0: i32, %arg1: i32) -> (i32, i32, i32) {
    %c0_i32 = arith.constant 0 : i32
    %c0_i32_0 = arith.constant 0 : i32
    %c0_i32_1 = arith.constant 0 : i32
    return %arg0, %c0_i32, %c0_i32_0 : i32, i32, i32
  }
  func.func @transform_1(%arg0: i32, %arg1: i32) -> (i32, i32, i32) {
    %c0_i32 = arith.constant 0 : i32
    %c0_i32_0 = arith.constant 0 : i32
    %c0_i32_1 = arith.constant 0 : i32
    return %arg0, %c0_i32, %c0_i32_0 : i32, i32, i32
  }
  func.func @transform_2(%arg0: i32, %arg1: i32) -> (i32, i32) {
    %c0_i32 = arith.constant 0 : i32
    %c0_i32_0 = arith.constant 0 : i32
    %c0_i32_1 = arith.constant 0 : i32
    return %c0_i32, %c0_i32_0 : i32, i32
  }
  func.func @transform_3(%arg0: i32, %arg1: i32) -> (i32, i32) {
    %c0_i32 = arith.constant 0 : i32
    %c0_i32_0 = arith.constant 0 : i32
    %c0_i32_1 = arith.constant 0 : i32
    return %c0_i32, %c0_i32_0 : i32, i32
  }
  func.func @transform_4(%arg0: i32, %arg1: i32) -> (i32, i32, i32) {
    %c0_i32 = arith.constant 0 : i32
    %c0_i32_0 = arith.constant 0 : i32
    %c0_i32_1 = arith.constant 0 : i32
    return %arg1, %c0_i32, %c0_i32_0 : i32, i32, i32
  }
  func.func @transform_5(%arg0: i32, %arg1: i32) -> (i32, i32, i32) {
    %c0_i32 = arith.constant 0 : i32
    %c0_i32_0 = arith.constant 0 : i32
    %c0_i32_1 = arith.constant 0 : i32
    return %arg1, %c0_i32, %c0_i32_0 : i32, i32, i32
  }
  func.func @transform_6(%arg0: i32, %arg1: i32) -> (i32, i32, i32) {
    %c0_i32 = arith.constant 0 : i32
    %c0_i32_0 = arith.constant 0 : i32
    %c0_i32_1 = arith.constant 0 : i32
    return %arg1, %c0_i32, %c0_i32_0 : i32, i32, i32
  }
  func.func @transform_7(%arg0: i32, %arg1: i32) -> (i32, i32, i32) {
    %c0_i32 = arith.constant 0 : i32
    %c0_i32_0 = arith.constant 0 : i32
    %c0_i32_1 = arith.constant 0 : i32
    return %arg1, %c0_i32, %c0_i32_0 : i32, i32, i32
  }
  func.func @transform_8(%arg0: i32, %arg1: i32) -> (i32, i32, i32) {
    %c0_i32 = arith.constant 0 : i32
    %c0_i32_0 = arith.constant 0 : i32
    %c0_i32_1 = arith.constant 0 : i32
    return %arg1, %c0_i32, %c0_i32_0 : i32, i32, i32
  }
  func.func @transform_9(%arg0: i32, %arg1: i32) -> (i32, i32, i32) {
    %c0_i32 = arith.constant 0 : i32
    %c0_i32_0 = arith.constant 0 : i32
    %c0_i32_1 = arith.constant 0 : i32
    return %arg1, %c0_i32, %c0_i32_0 : i32, i32, i32
  }
  func.func @transform_10(%arg0: i32, %arg1: i32) -> (i32, i32, i32) {
    %c0_i32 = arith.constant 0 : i32
    %c0_i32_0 = arith.constant 0 : i32
    %c0_i32_1 = arith.constant 0 : i32
    return %arg1, %c0_i32, %c0_i32_0 : i32, i32, i32
  }
  func.func @transform_11(%arg0: i32, %arg1: i32) -> (i32, i32, i32) {
    %c0_i32 = arith.constant 0 : i32
    %c0_i32_0 = arith.constant 0 : i32
    %c0_i32_1 = arith.constant 0 : i32
    return %arg1, %c0_i32, %c0_i32_0 : i32, i32, i32
  }
  func.func @transform_12(%arg0: i32, %arg1: i32) -> (i32, i32, i32) {
    %c0_i32 = arith.constant 0 : i32
    %c0_i32_0 = arith.constant 0 : i32
    %c0_i32_1 = arith.constant 0 : i32
    return %arg1, %c0_i32, %c0_i32_0 : i32, i32, i32
  }
  func.func @transform_13(%arg0: i32, %arg1: i32) -> (i32, i32, i32) {
    %c0_i32 = arith.constant 0 : i32
    %c0_i32_0 = arith.constant 0 : i32
    %c0_i32_1 = arith.constant 0 : i32
    return %arg1, %c0_i32, %c0_i32_0 : i32, i32, i32
  }
  func.func @transform_14(%arg0: i32, %arg1: i32) -> (i32, i32, i32) {
    %c0_i32 = arith.constant 0 : i32
    %c0_i32_0 = arith.constant 0 : i32
    %c0_i32_1 = arith.constant 0 : i32
    return %arg1, %c0_i32, %c0_i32_0 : i32, i32, i32
  }
  func.func @transform_15(%arg0: i32, %arg1: i32) -> (i32, i32, i32) {
    %c0_i32 = arith.constant 0 : i32
    %c0_i32_0 = arith.constant 0 : i32
    %c0_i32_1 = arith.constant 0 : i32
    return %arg1, %c0_i32, %c0_i32_0 : i32, i32, i32
  }
  func.func @transform_16(%arg0: i32, %arg1: i32) -> (i32, i32) {
    %c0_i32 = arith.constant 0 : i32
    %c0_i32_0 = arith.constant 0 : i32
    %c0_i32_1 = arith.constant 0 : i32
    return %c0_i32, %c0_i32_0 : i32, i32
  }
  func.func @transform_17(%arg0: i32, %arg1: i32) -> (i32, i32) {
    %c0_i32 = arith.constant 0 : i32
    %c0_i32_0 = arith.constant 0 : i32
    %c0_i32_1 = arith.constant 0 : i32
    return %c0_i32, %c0_i32_0 : i32, i32
  }
  func.func @transform_18(%arg0: i32, %arg1: i32) -> (i32, i32) {
    %c0_i32 = arith.constant 0 : i32
    %c0_i32_0 = arith.constant 0 : i32
    %c0_i32_1 = arith.constant 0 : i32
    return %c0_i32, %c0_i32_0 : i32, i32
  }
  func.func @transform_19(%arg0: i32, %arg1: i32) -> (i32, i32) {
    %c0_i32 = arith.constant 0 : i32
    %c0_i32_0 = arith.constant 0 : i32
    %c0_i32_1 = arith.constant 0 : i32
    return %c0_i32, %c0_i32_0 : i32, i32
  }
  func.func @transform_20(%arg0: i32, %arg1: i32) -> (i32, i32, i32) {
    %c0_i32 = arith.constant 0 : i32
    %c0_i32_0 = arith.constant 0 : i32
    %c0_i32_1 = arith.constant 0 : i32
    return %arg0, %c0_i32, %c0_i32_0 : i32, i32, i32
  }
}

</mosaic_0001>

<llo_original>
// kernel: bias_classifier_forward.1
$region0: #{bias_classifier_forward.1}
  #allocation0 [shape = 'u32[]', space=smem, size = 0x4, offset = 0x4, fixed_abs, tag = 'smem constant byte address 0x4 - core index']
  #allocation1 [shape = 'u32[144,128]{1,0:T(1,128)}', space=vmem, size = 0x12000, scoped, tag = 'internal scratch']
  #allocation2 [shape = 'f32[8,128]{1,0:T(8,128)}', space=vmem, size = 0x1000, scoped, tag = 'scratch operand']
  %s0 = inlined_call_operand.vmem [shape: f32[2,8,128], index: 0, kind: input, shape index: {}]
  %s1 = inlined_call_operand.vmem [shape: f32[2,1,8], index: 1, kind: input, shape index: {}]
  %s2 = inlined_call_operand.vmem [shape: f32[1,128], index: 2, kind: input, shape index: {}]
  %s3 = inlined_call_operand.vmem [shape: f32[1,128], index: 3, kind: input, shape index: {}]
  %s4 = inlined_call_operand.hbm [shape: bf16[2,128,384], index: 4, kind: input, shape index: {}]
  %s5 = inlined_call_operand.vmem [shape: f32[2,1,384], index: 5, kind: input, shape index: {}]
  %s6 = inlined_call_operand.vmem [shape: bf16[2,128,128], index: 6, kind: input, shape index: {}]
  %s7 = inlined_call_operand.vmem [shape: f32[2,1,128], index: 7, kind: input, shape index: {}]
  %s8 = inlined_call_operand.vmem [shape: f32[2,1,128], index: 8, kind: input, shape index: {}]
  %s9 = inlined_call_operand.vmem [shape: f32[2,1,128], index: 9, kind: input, shape index: {}]
  %s10 = inlined_call_operand.hbm [shape: bf16[2,128,256], index: 10, kind: input, shape index: {}]
  %s11 = inlined_call_operand.vmem [shape: f32[2,1,256], index: 11, kind: input, shape index: {}]
  %s12 = inlined_call_operand.hbm [shape: bf16[2,256,128], index: 12, kind: input, shape index: {}]
  %s13 = inlined_call_operand.vmem [shape: f32[2,1,128], index: 13, kind: input, shape index: {}]
  %s14 = inlined_call_operand.vmem [shape: f32[2,1,128], index: 14, kind: input, shape index: {}]
  %s15 = inlined_call_operand.vmem [shape: f32[2,1,128], index: 15, kind: input, shape index: {}]
  %s16 = inlined_call_operand.vmem [shape: bf16[128,128], index: 16, kind: input, shape index: {}]
  %s17 = inlined_call_operand.vmem [shape: f32[1,128], index: 17, kind: input, shape index: {}]
  %s18 = inlined_call_operand.hbm [shape: bf16[128,128], index: 18, kind: input, shape index: {}]
  %s19 = inlined_call_operand.vmem [shape: f32[1,128], index: 19, kind: input, shape index: {}]
  %s20 = inlined_call_operand.vmem [shape: f32[2,8,128], index: 20, kind: output, shape index: {}]
  %s21 = sld [smem:[#allocation0]]
  $region137: #{bias_classifier_forward.1} parent=0
    _
  %s23 = ssub.s32 1, %s21
  %s24 = scalar_select 0, %s23, %s21
  $region1: #{bias_classifier_forward.1} parent=0
    #allocation3 [shape = 'u8[196608]{0}', space=vmem, size = 0x30000, scoped, tag = 'input window, operand 4']
    #allocation4 [shape = 's32[2]{0}', space=sflag, size = 0x8, scoped, tag = 'scoped memory for bias_classifier_forward.1']
    #allocation5 [shape = 'u8[131072]{0}', space=vmem, size = 0x20000, scoped, tag = 'input window, operand 10']
    #allocation6 [shape = 's32[2]{0}', space=sflag, size = 0x8, scoped, tag = 'scoped memory for bias_classifier_forward.1']
    #allocation7 [shape = 'u8[131072]{0}', space=vmem, size = 0x20000, scoped, tag = 'input window, operand 12']
    #allocation8 [shape = 'u8[32768]{0}', space=vmem, size = 0x8000, scoped, tag = 'input window, operand 18, single buffered']
    #allocation9 [shape = 's32[1]{0}', space=sflag, size = 0x4, scoped, tag = 'scoped memory for bias_classifier_forward.1']
    %25 = vsyncpa [#allocation4], 0
    %s26 = scalar_lea.sflag [#allocation4], 1
    %27 = vsyncpa %s26, 0
    %28 = vsyncpa [#allocation6], 0
    %s29 = scalar_lea.sflag [#allocation6], 1
    %30 = vsyncpa %s29, 0
    %31 = vsyncpa [#allocation9], 0
    loop: start=0, step=1, limit=6
    $region2: #{bias_classifier_forward.1} parent=1 // loop_pre_header
      _
    $region3: #{bias_classifier_forward.1} parent=1 // loop_header
      %s33 = sphi 0, %s37
      %p34 = scmp.ge.s32.totalorder %s33, 6
      %s40 = sphi 0, %s52
      %s41 = sphi 0, %s48
      %s42 = sphi 0, %s40
      %s43 = sphi 0, %s41
      %s44 = sphi 0, %s42
      %s45 = sphi 0, %s43
      %s55 = sphi 0, %s57
      %s58 = sphi 0, %s55
      %s59 = sphi 0, %s58
      %s75 = sphi 0, %s59
      %s81 = sphi 0, %s83
      %s84 = sphi 0, %s81
      %s85 = sphi 0, %s84
      %s101 = sphi 0, %s85
      %s105 = sphi 0, %s105
      %s107 = sphi 0, %s105
      %s108 = sphi 0, %s107
      %s122 = sphi 0, %s108
      %s126 = sphi 0, %s126
      %s128 = sphi 0, %s126
      %s129 = sphi 0, %s128
      %s143 = sphi 0, %s129
      %s149 = sphi 0, %s151
      %s152 = sphi 0, %s149
      %s153 = sphi 0, %s152
      %s169 = sphi 0, %s153
      %s175 = sphi 0, %s177
      %s178 = sphi 0, %s175
      %s179 = sphi 0, %s178
      %s195 = sphi 0, %s179
      %s201 = sphi 0, %s203
      %s204 = sphi 0, %s201
      %s205 = sphi 0, %s204
      %s221 = sphi 0, %s205
      %s227 = sphi 0, %s229
      %s230 = sphi 0, %s227
      %s231 = sphi 0, %s230
      %s247 = sphi 0, %s231
      %s253 = sphi 0, %s255
      %s256 = sphi 0, %s253
      %s257 = sphi 0, %s256
      %s273 = sphi 0, %s257
      %s279 = sphi 0, %s281
      %s282 = sphi 0, %s279
      %s283 = sphi 0, %s282
      %s299 = sphi 0, %s283
      %s305 = sphi 0, %s307
      %s308 = sphi 0, %s305
      %s309 = sphi 0, %s308
      %s325 = sphi 0, %s309
      %s331 = sphi 0, %s333
      %s334 = sphi 0, %s331
      %s335 = sphi 0, %s334
      %s351 = sphi 0, %s335
      %s357 = sphi 0, %s359
      %s360 = sphi 0, %s357
      %s361 = sphi 0, %s360
      %s377 = sphi 0, %s361
      %s383 = sphi 0, %s385
      %s386 = sphi 0, %s383
      %s387 = sphi 0, %s386
      %s403 = sphi 0, %s387
      %s409 = sphi 0, %s411
      %s412 = sphi 0, %s409
      %s413 = sphi 0, %s412
      %s429 = sphi 0, %s413
      %s435 = sphi 0, %s437
      %s438 = sphi 0, %s435
      %s439 = sphi 0, %s438
      %s455 = sphi 0, %s439
      %s459 = sphi 0, %s459
      %s461 = sphi 0, %s459
      %s462 = sphi 0, %s461
      %s476 = sphi 0, %s462
      %s480 = sphi 0, %s480
      %s482 = sphi 0, %s480
      %s483 = sphi 0, %s482
      %s497 = sphi 0, %s483
      %s501 = sphi 0, %s501
      %s503 = sphi 0, %s501
      %s504 = sphi 0, %s503
      %s518 = sphi 0, %s504
      %s522 = sphi 0, %s522
      %s524 = sphi 0, %s522
      %s525 = sphi 0, %s524
      %s539 = sphi 0, %s525
      %s545 = sphi 0, %s547
      %s548 = sphi 0, %s545
      %s549 = sphi 0, %s548
      %s565 = sphi 0, %s549
    $region4: #{bias_classifier_forward.1} parent=1 // loop_header_branch
      %36 = sbr.rel (%p34) target = $region8
    $region5: #{bias_classifier_forward.1} parent=1 // loop_body
      %s38 = ssub.s32 %s33, 1
      %s39 = ssub.s32 %s33, 2
      %s46 = sadd.s32 1, %s41
      %p47 = scmp.ge.s32.totalorder %s46, 2
      %s48 = scalar_select %p47, 0, %s46
      %s49 = sadd.s32 1, %s40
      %s50 = scalar_select %p47, %s49, %s40
      %p51 = scmp.ge.s32.totalorder %s50, 2
      %s52 = scalar_select %p51, 0, %s50
      %s53 = ssub.s32 %s40, %s52
      %p54 = scmp.eq.s32.totalorder %s53, 0
      %s56 = sadd.s32 %s55, 1
      %s57 = scalar_select %p54, %s55, %s56
      %p60 = pneg %p54
      %p61 = scmp.eq.s32.totalorder %s33, 3
      %p62 = por %p60, %p61
      %p63 = scmp.ne.s32.totalorder %s55, %s58
      %p64 = scmp.eq.s32.totalorder %s33, 0
      %p65 = por %p63, %p64
      %p66 = scmp.ne.s32.totalorder %s55, %s58
      %p67 = scmp.eq.s32.totalorder %s38, 3
      %p68 = por %p66, %p67
      %p69 = scmp.ne.s32.totalorder %s58, %s59
      %p70 = scmp.eq.s32.totalorder %s38, 0
      %p71 = por %p69, %p70
      %p72 = scmp.ne.s32.totalorder %s58, %s59
      %p73 = scmp.eq.s32.totalorder %s39, 3
      %p74 = por %p72, %p73
      %p76 = scmp.ne.s32.totalorder %s59, %s75
      %p77 = scmp.eq.s32.totalorder %s39, 0
      %p78 = por %p76, %p77
      %s79 = ssub.s32 %s40, %s52
      %p80 = scmp.eq.s32.totalorder %s79, 0
      %s82 = sadd.s32 %s81, 1
      %s83 = scalar_select %p80, %s81, %s82
      %p86 = pneg %p80
      %p87 = scmp.eq.s32.totalorder %s33, 3
      %p88 = por %p86, %p87
      %p89 = scmp.ne.s32.totalorder %s81, %s84
      %p90 = scmp.eq.s32.totalorder %s33, 0
      %p91 = por %p89, %p90
      %p92 = scmp.ne.s32.totalorder %s81, %s84
      %p93 = scmp.eq.s32.totalorder %s38, 3
      %p94 = por %p92, %p93
      %p95 = scmp.ne.s32.totalorder %s84, %s85
      %p96 = scmp.eq.s32.totalorder %s38, 0
      %p97 = por %p95, %p96
      %p98 = scmp.ne.s32.totalorder %s84, %s85
      %p99 = scmp.eq.s32.totalorder %s39, 3
      %p100 = por %p98, %p99
      %p102 = scmp.ne.s32.totalorder %s85, %s101
      %p103 = scmp.eq.s32.totalorder %s39, 0
      %p104 = por %p102, %p103
      %s106 = sadd.s32 %s105, 1
      %p109 = scmp.eq.s32.totalorder %s33, 3
      %p110 = scmp.ne.s32.totalorder %s105, %s107
      %p111 = scmp.eq.s32.totalorder %s33, 0
      %p112 = por %p110, %p111
      %p113 = scmp.ne.s32.totalorder %s105, %s107
      %p114 = scmp.eq.s32.totalorder %s38, 3
      %p115 = por %p113, %p114
      %p116 = scmp.ne.s32.totalorder %s107, %s108
      %p117 = scmp.eq.s32.totalorder %s38, 0
      %p118 = por %p116, %p117
      %p119 = scmp.ne.s32.totalorder %s107, %s108
      %p120 = scmp.eq.s32.totalorder %s39, 3
      %p121 = por %p119, %p120
      %p123 = scmp.ne.s32.totalorder %s108, %s122
      %p124 = scmp.eq.s32.totalorder %s39, 0
      %p125 = por %p123, %p124
      %s127 = sadd.s32 %s126, 1
      %p130 = scmp.eq.s32.totalorder %s33, 3
      %p131 = scmp.ne.s32.totalorder %s126, %s128
      %p132 = scmp.eq.s32.totalorder %s33, 0
      %p133 = por %p131, %p132
      %p134 = scmp.ne.s32.totalorder %s126, %s128
      %p135 = scmp.eq.s32.totalorder %s38, 3
      %p136 = por %p134, %p135
      %p137 = scmp.ne.s32.totalorder %s128, %s129
      %p138 = scmp.eq.s32.totalorder %s38, 0
      %p139 = por %p137, %p138
      %p140 = scmp.ne.s32.totalorder %s128, %s129
      %p141 = scmp.eq.s32.totalorder %s39, 3
      %p142 = por %p140, %p141
      %p144 = scmp.ne.s32.totalorder %s129, %s143
      %p145 = scmp.eq.s32.totalorder %s39, 0
      %p146 = por %p144, %p145
      %s147 = ssub.s32 %s41, %s48
      %p148 = scmp.eq.s32.totalorder %s147, 0
      %s150 = sadd.s32 %s149, 1
      %s151 = scalar_select %p148, %s149, %s150
      %p154 = pneg %p148
      %p155 = scmp.eq.s32.totalorder %s33, 3
      %p156 = por %p154, %p155
      %p157 = scmp.ne.s32.totalorder %s149, %s152
      %p158 = scmp.eq.s32.totalorder %s33, 0
      %p159 = por %p157, %p158
      %p160 = scmp.ne.s32.totalorder %s149, %s152
      %p161 = scmp.eq.s32.totalorder %s38, 3
      %p162 = por %p160, %p161
      %p163 = scmp.ne.s32.totalorder %s152, %s153
      %p164 = scmp.eq.s32.totalorder %s38, 0
      %p165 = por %p163, %p164
      %p166 = scmp.ne.s32.totalorder %s152, %s153
      %p167 = scmp.eq.s32.totalorder %s39, 3
      %p168 = por %p166, %p167
      %p170 = scmp.ne.s32.totalorder %s153, %s169
      %p171 = scmp.eq.s32.totalorder %s39, 0
      %p172 = por %p170, %p171
      %s173 = ssub.s32 %s41, %s48
      %p174 = scmp.eq.s32.totalorder %s173, 0
      %s176 = sadd.s32 %s175, 1
      %s177 = scalar_select %p174, %s175, %s176
      %p180 = pneg %p174
      %p181 = scmp.eq.s32.totalorder %s33, 3
      %p182 = por %p180, %p181
      %p183 = scmp.ne.s32.totalorder %s175, %s178
      %p184 = scmp.eq.s32.totalorder %s33, 0
      %p185 = por %p183, %p184
      %p186 = scmp.ne.s32.totalorder %s175, %s178
      %p187 = scmp.eq.s32.totalorder %s38, 3
      %p188 = por %p186, %p187
      %p189 = scmp.ne.s32.totalorder %s178, %s179
      %p190 = scmp.eq.s32.totalorder %s38, 0
      %p191 = por %p189, %p190
      %p192 = scmp.ne.s32.totalorder %s178, %s179
      %p193 = scmp.eq.s32.totalorder %s39, 3
      %p194 = por %p192, %p193
      %p196 = scmp.ne.s32.totalorder %s179, %s195
      %p197 = scmp.eq.s32.totalorder %s39, 0
      %p198 = por %p196, %p197
      %s199 = ssub.s32 %s41, %s48
      %p200 = scmp.eq.s32.totalorder %s199, 0
      %s202 = sadd.s32 %s201, 1
      %s203 = scalar_select %p200, %s201, %s202
      %p206 = pneg %p200
      %p207 = scmp.eq.s32.totalorder %s33, 3
      %p208 = por %p206, %p207
      %p209 = scmp.ne.s32.totalorder %s201, %s204
      %p210 = scmp.eq.s32.totalorder %s33, 0
      %p211 = por %p209, %p210
      %p212 = scmp.ne.s32.totalorder %s201, %s204
      %p213 = scmp.eq.s32.totalorder %s38, 3
      %p214 = por %p212, %p213
      %p215 = scmp.ne.s32.totalorder %s204, %s205
      %p216 = scmp.eq.s32.totalorder %s38, 0
      %p217 = por %p215, %p216
      %p218 = scmp.ne.s32.totalorder %s204, %s205
      %p219 = scmp.eq.s32.totalorder %s39, 3
      %p220 = por %p218, %p219
      %p222 = scmp.ne.s32.totalorder %s205, %s221
      %p223 = scmp.eq.s32.totalorder %s39, 0
      %p224 = por %p222, %p223
      %s225 = ssub.s32 %s41, %s48
      %p226 = scmp.eq.s32.totalorder %s225, 0
      %s228 = sadd.s32 %s227, 1
      %s229 = scalar_select %p226, %s227, %s228
      %p232 = pneg %p226
      %p233 = scmp.eq.s32.totalorder %s33, 3
      %p234 = por %p232, %p233
      %p235 = scmp.ne.s32.totalorder %s227, %s230
      %p236 = scmp.eq.s32.totalorder %s33, 0
      %p237 = por %p235, %p236
      %p238 = scmp.ne.s32.totalorder %s227, %s230
      %p239 = scmp.eq.s32.totalorder %s38, 3
      %p240 = por %p238, %p239
      %p241 = scmp.ne.s32.totalorder %s230, %s231
      %p242 = scmp.eq.s32.totalorder %s38, 0
      %p243 = por %p241, %p242
      %p244 = scmp.ne.s32.totalorder %s230, %s231
      %p245 = scmp.eq.s32.totalorder %s39, 3
      %p246 = por %p244, %p245
      %p248 = scmp.ne.s32.totalorder %s231, %s247
      %p249 = scmp.eq.s32.totalorder %s39, 0
      %p250 = por %p248, %p249
      %s251 = ssub.s32 %s41, %s48
      %p252 = scmp.eq.s32.totalorder %s251, 0
      %s254 = sadd.s32 %s253, 1
      %s255 = scalar_select %p252, %s253, %s254
      %p258 = pneg %p252
      %p259 = scmp.eq.s32.totalorder %s33, 3
      %p260 = por %p258, %p259
      %p261 = scmp.ne.s32.totalorder %s253, %s256
      %p262 = scmp.eq.s32.totalorder %s33, 0
      %p263 = por %p261, %p262
      %p264 = scmp.ne.s32.totalorder %s253, %s256
      %p265 = scmp.eq.s32.totalorder %s38, 3
      %p266 = por %p264, %p265
      %p267 = scmp.ne.s32.totalorder %s256, %s257
      %p268 = scmp.eq.s32.totalorder %s38, 0
      %p269 = por %p267, %p268
      %p270 = scmp.ne.s32.totalorder %s256, %s257
      %p271 = scmp.eq.s32.totalorder %s39, 3
      %p272 = por %p270, %p271
      %p274 = scmp.ne.s32.totalorder %s257, %s273
      %p275 = scmp.eq.s32.totalorder %s39, 0
      %p276 = por %p274, %p275
      %s277 = ssub.s32 %s41, %s48
      %p278 = scmp.eq.s32.totalorder %s277, 0
      %s280 = sadd.s32 %s279, 1
      %s281 = scalar_select %p278, %s279, %s280
      %p284 = pneg %p278
      %p285 = scmp.eq.s32.totalorder %s33, 3
      %p286 = por %p284, %p285
      %p287 = scmp.ne.s32.totalorder %s279, %s282
      %p288 = scmp.eq.s32.totalorder %s33, 0
      %p289 = por %p287, %p288
      %p290 = scmp.ne.s32.totalorder %s279, %s282
      %p291 = scmp.eq.s32.totalorder %s38, 3
      %p292 = por %p290, %p291
      %p293 = scmp.ne.s32.totalorder %s282, %s283
      %p294 = scmp.eq.s32.totalorder %s38, 0
      %p295 = por %p293, %p294
      %p296 = scmp.ne.s32.totalorder %s282, %s283
      %p297 = scmp.eq.s32.totalorder %s39, 3
      %p298 = por %p296, %p297
      %p300 = scmp.ne.s32.totalorder %s283, %s299
      %p301 = scmp.eq.s32.totalorder %s39, 0
      %p302 = por %p300, %p301
      %s303 = ssub.s32 %s41, %s48
      %p304 = scmp.eq.s32.totalorder %s303, 0
      %s306 = sadd.s32 %s305, 1
      %s307 = scalar_select %p304, %s305, %s306
      %p310 = pneg %p304
      %p311 = scmp.eq.s32.totalorder %s33, 3
      %p312 = por %p310, %p311
      %p313 = scmp.ne.s32.totalorder %s305, %s308
      %p314 = scmp.eq.s32.totalorder %s33, 0
      %p315 = por %p313, %p314
      %p316 = scmp.ne.s32.totalorder %s305, %s308
      %p317 = scmp.eq.s32.totalorder %s38, 3
      %p318 = por %p316, %p317
      %p319 = scmp.ne.s32.totalorder %s308, %s309
      %p320 = scmp.eq.s32.totalorder %s38, 0
      %p321 = por %p319, %p320
      %p322 = scmp.ne.s32.totalorder %s308, %s309
      %p323 = scmp.eq.s32.totalorder %s39, 3
      %p324 = por %p322, %p323
      %p326 = scmp.ne.s32.totalorder %s309, %s325
      %p327 = scmp.eq.s32.totalorder %s39, 0
      %p328 = por %p326, %p327
      %s329 = ssub.s32 %s41, %s48
      %p330 = scmp.eq.s32.totalorder %s329, 0
      %s332 = sadd.s32 %s331, 1
      %s333 = scalar_select %p330, %s331, %s332
      %p336 = pneg %p330
      %p337 = scmp.eq.s32.totalorder %s33, 3
      %p338 = por %p336, %p337
      %p339 = scmp.ne.s32.totalorder %s331, %s334
      %p340 = scmp.eq.s32.totalorder %s33, 0
      %p341 = por %p339, %p340
      %p342 = scmp.ne.s32.totalorder %s331, %s334
      %p343 = scmp.eq.s32.totalorder %s38, 3
      %p344 = por %p342, %p343
      %p345 = scmp.ne.s32.totalorder %s334, %s335
      %p346 = scmp.eq.s32.totalorder %s38, 0
      %p347 = por %p345, %p346
      %p348 = scmp.ne.s32.totalorder %s334, %s335
      %p349 = scmp.eq.s32.totalorder %s39, 3
      %p350 = por %p348, %p349
      %p352 = scmp.ne.s32.totalorder %s335, %s351
      %p353 = scmp.eq.s32.totalorder %s39, 0
      %p354 = por %p352, %p353
      %s355 = ssub.s32 %s41, %s48
      %p356 = scmp.eq.s32.totalorder %s355, 0
      %s358 = sadd.s32 %s357, 1
      %s359 = scalar_select %p356, %s357, %s358
      %p362 = pneg %p356
      %p363 = scmp.eq.s32.totalorder %s33, 3
      %p364 = por %p362, %p363
      %p365 = scmp.ne.s32.totalorder %s357, %s360
      %p366 = scmp.eq.s32.totalorder %s33, 0
      %p367 = por %p365, %p366
      %p368 = scmp.ne.s32.totalorder %s357, %s360
      %p369 = scmp.eq.s32.totalorder %s38, 3
      %p370 = por %p368, %p369
      %p371 = scmp.ne.s32.totalorder %s360, %s361
      %p372 = scmp.eq.s32.totalorder %s38, 0
      %p373 = por %p371, %p372
      %p374 = scmp.ne.s32.totalorder %s360, %s361
      %p375 = scmp.eq.s32.totalorder %s39, 3
      %p376 = por %p374, %p375
      %p378 = scmp.ne.s32.totalorder %s361, %s377
      %p379 = scmp.eq.s32.totalorder %s39, 0
      %p380 = por %p378, %p379
      %s381 = ssub.s32 %s41, %s48
      %p382 = scmp.eq.s32.totalorder %s381, 0
      %s384 = sadd.s32 %s383, 1
      %s385 = scalar_select %p382, %s383, %s384
      %p388 = pneg %p382
      %p389 = scmp.eq.s32.totalorder %s33, 3
      %p390 = por %p388, %p389
      %p391 = scmp.ne.s32.totalorder %s383, %s386
      %p392 = scmp.eq.s32.totalorder %s33, 0
      %p393 = por %p391, %p392
      %p394 = scmp.ne.s32.totalorder %s383, %s386
      %p395 = scmp.eq.s32.totalorder %s38, 3
      %p396 = por %p394, %p395
      %p397 = scmp.ne.s32.totalorder %s386, %s387
      %p398 = scmp.eq.s32.totalorder %s38, 0
      %p399 = por %p397, %p398
      %p400 = scmp.ne.s32.totalorder %s386, %s387
      %p401 = scmp.eq.s32.totalorder %s39, 3
      %p402 = por %p400, %p401
      %p404 = scmp.ne.s32.totalorder %s387, %s403
      %p405 = scmp.eq.s32.totalorder %s39, 0
      %p406 = por %p404, %p405
      %s407 = ssub.s32 %s41, %s48
      %p408 = scmp.eq.s32.totalorder %s407, 0
      %s410 = sadd.s32 %s409, 1
      %s411 = scalar_select %p408, %s409, %s410
      %p414 = pneg %p408
      %p415 = scmp.eq.s32.totalorder %s33, 3
      %p416 = por %p414, %p415
      %p417 = scmp.ne.s32.totalorder %s409, %s412
      %p418 = scmp.eq.s32.totalorder %s33, 0
      %p419 = por %p417, %p418
      %p420 = scmp.ne.s32.totalorder %s409, %s412
      %p421 = scmp.eq.s32.totalorder %s38, 3
      %p422 = por %p420, %p421
      %p423 = scmp.ne.s32.totalorder %s412, %s413
      %p424 = scmp.eq.s32.totalorder %s38, 0
      %p425 = por %p423, %p424
      %p426 = scmp.ne.s32.totalorder %s412, %s413
      %p427 = scmp.eq.s32.totalorder %s39, 3
      %p428 = por %p426, %p427
      %p430 = scmp.ne.s32.totalorder %s413, %s429
      %p431 = scmp.eq.s32.totalorder %s39, 0
      %p432 = por %p430, %p431
      %s433 = ssub.s32 %s41, %s48
      %p434 = scmp.eq.s32.totalorder %s433, 0
      %s436 = sadd.s32 %s435, 1
      %s437 = scalar_select %p434, %s435, %s436
      %p440 = pneg %p434
      %p441 = scmp.eq.s32.totalorder %s33, 3
      %p442 = por %p440, %p441
      %p443 = scmp.ne.s32.totalorder %s435, %s438
      %p444 = scmp.eq.s32.totalorder %s33, 0
      %p445 = por %p443, %p444
      %p446 = scmp.ne.s32.totalorder %s435, %s438
      %p447 = scmp.eq.s32.totalorder %s38, 3
      %p448 = por %p446, %p447
      %p449 = scmp.ne.s32.totalorder %s438, %s439
      %p450 = scmp.eq.s32.totalorder %s38, 0
      %p451 = por %p449, %p450
      %p452 = scmp.ne.s32.totalorder %s438, %s439
      %p453 = scmp.eq.s32.totalorder %s39, 3
      %p454 = por %p452, %p453
      %p456 = scmp.ne.s32.totalorder %s439, %s455
      %p457 = scmp.eq.s32.totalorder %s39, 0
      %p458 = por %p456, %p457
      %s460 = sadd.s32 %s459, 1
      %p463 = scmp.eq.s32.totalorder %s33, 3
      %p464 = scmp.ne.s32.totalorder %s459, %s461
      %p465 = scmp.eq.s32.totalorder %s33, 0
      %p466 = por %p464, %p465
      %p467 = scmp.ne.s32.totalorder %s459, %s461
      %p468 = scmp.eq.s32.totalorder %s38, 3
      %p469 = por %p467, %p468
      %p470 = scmp.ne.s32.totalorder %s461, %s462
      %p471 = scmp.eq.s32.totalorder %s38, 0
      %p472 = por %p470, %p471
      %p473 = scmp.ne.s32.totalorder %s461, %s462
      %p474 = scmp.eq.s32.totalorder %s39, 3
      %p475 = por %p473, %p474
      %p477 = scmp.ne.s32.totalorder %s462, %s476
      %p478 = scmp.eq.s32.totalorder %s39, 0
      %p479 = por %p477, %p478
      %s481 = sadd.s32 %s480, 1
      %p484 = scmp.eq.s32.totalorder %s33, 3
      %p485 = scmp.ne.s32.totalorder %s480, %s482
      %p486 = scmp.eq.s32.totalorder %s33, 0
      %p487 = por %p485, %p486
      %p488 = scmp.ne.s32.totalorder %s480, %s482
      %p489 = scmp.eq.s32.totalorder %s38, 3
      %p490 = por %p488, %p489
      %p491 = scmp.ne.s32.totalorder %s482, %s483
      %p492 = scmp.eq.s32.totalorder %s38, 0
      %p493 = por %p491, %p492
      %p494 = scmp.ne.s32.totalorder %s482, %s483
      %p495 = scmp.eq.s32.totalorder %s39, 3
      %p496 = por %p494, %p495
      %p498 = scmp.ne.s32.totalorder %s483, %s497
      %p499 = scmp.eq.s32.totalorder %s39, 0
      %p500 = por %p498, %p499
      %s502 = sadd.s32 %s501, 1
      %p505 = scmp.eq.s32.totalorder %s33, 3
      %p506 = scmp.ne.s32.totalorder %s501, %s503
      %p507 = scmp.eq.s32.totalorder %s33, 0
      %p508 = por %p506, %p507
      %p509 = scmp.ne.s32.totalorder %s501, %s503
      %p510 = scmp.eq.s32.totalorder %s38, 3
      %p511 = por %p509, %p510
      %p512 = scmp.ne.s32.totalorder %s503, %s504
      %p513 = scmp.eq.s32.totalorder %s38, 0
      %p514 = por %p512, %p513
      %p515 = scmp.ne.s32.totalorder %s503, %s504
      %p516 = scmp.eq.s32.totalorder %s39, 3
      %p517 = por %p515, %p516
      %p519 = scmp.ne.s32.totalorder %s504, %s518
      %p520 = scmp.eq.s32.totalorder %s39, 0
      %p521 = por %p519, %p520
      %s523 = sadd.s32 %s522, 1
      %p526 = scmp.eq.s32.totalorder %s33, 3
      %p527 = scmp.ne.s32.totalorder %s522, %s524
      %p528 = scmp.eq.s32.totalorder %s33, 0
      %p529 = por %p527, %p528
      %p530 = scmp.ne.s32.totalorder %s522, %s524
      %p531 = scmp.eq.s32.totalorder %s38, 3
      %p532 = por %p530, %p531
      %p533 = scmp.ne.s32.totalorder %s524, %s525
      %p534 = scmp.eq.s32.totalorder %s38, 0
      %p535 = por %p533, %p534
      %p536 = scmp.ne.s32.totalorder %s524, %s525
      %p537 = scmp.eq.s32.totalorder %s39, 3
      %p538 = por %p536, %p537
      %p540 = scmp.ne.s32.totalorder %s525, %s539
      %p541 = scmp.eq.s32.totalorder %s39, 0
      %p542 = por %p540, %p541
      %s543 = ssub.s32 %s40, %s52
      %p544 = scmp.eq.s32.totalorder %s543, 0
      %s546 = sadd.s32 %s545, 1
      %s547 = scalar_select %p544, %s545, %s546
      %p550 = pneg %p544
      %p551 = scmp.eq.s32.totalorder %s33, 3
      %p552 = por %p550, %p551
      %p553 = scmp.ne.s32.totalorder %s545, %s548
      %p554 = scmp.eq.s32.totalorder %s33, 0
      %p555 = por %p553, %p554
      %p556 = scmp.ne.s32.totalorder %s545, %s548
      %p557 = scmp.eq.s32.totalorder %s38, 3
      %p558 = por %p556, %p557
      %p559 = scmp.ne.s32.totalorder %s548, %s549
      %p560 = scmp.eq.s32.totalorder %s38, 0
      %p561 = por %p559, %p560
      %p562 = scmp.ne.s32.totalorder %s548, %s549
      %p563 = scmp.eq.s32.totalorder %s39, 3
      %p564 = por %p562, %p563
      %p566 = scmp.ne.s32.totalorder %s549, %s565
      %p567 = scmp.eq.s32.totalorder %s39, 0
      %p568 = por %p566, %p567
      %p569 = scmp.le.s32.totalorder 1, %s33
      %p570 = scmp.lt.s32.totalorder %s33, 5
      %p571 = pnand %p569, %p570
      %p572 = pneg %p571
      // Predicated region
      $region9: #{bias_classifier_forward.1} parent=5 // pred_check
        _
      $region10: #{bias_classifier_forward.1} parent=5 // pred_check_branch
        %574 = sbr.rel (%p571) target = $region12
      $region11: #{bias_classifier_forward.1} parent=5 // pred_region
        %s575 = ssub.s32 %s33, 1
        // Predicated region
        $region13: #{bias_classifier_forward.1} parent=11 // pred_check
          %p576 = pneg %p118
        $region14: #{bias_classifier_forward.1} parent=11 // pred_check_branch
          %578 = sbr.rel (%p576) target = $region16
        $region15: #{bias_classifier_forward.1} parent=11 // pred_region
          _
        $region16: #{bias_classifier_forward.1} parent=11 // pred_fallthru
          _
        // Predicated region
        $region17: #{bias_classifier_forward.1} parent=11 // pred_check
          %p579 = pneg %p139
        $region18: #{bias_classifier_forward.1} parent=11 // pred_check_branch
          %581 = sbr.rel (%p579) target = $region20
        $region19: #{bias_classifier_forward.1} parent=11 // pred_region
          _
        $region20: #{bias_classifier_forward.1} parent=11 // pred_fallthru
          _
        // Predicated region
        $region21: #{bias_classifier_forward.1} parent=11 // pred_check
          %p582 = pneg %p472
        $region22: #{bias_classifier_forward.1} parent=11 // pred_check_branch
          %584 = sbr.rel (%p582) target = $region24
        $region23: #{bias_classifier_forward.1} parent=11 // pred_region
          _
        $region24: #{bias_classifier_forward.1} parent=11 // pred_fallthru
          _
        // Predicated region
        $region25: #{bias_classifier_forward.1} parent=11 // pred_check
          %p585 = pneg %p493
        $region26: #{bias_classifier_forward.1} parent=11 // pred_check_branch
          %587 = sbr.rel (%p585) target = $region28
        $region27: #{bias_classifier_forward.1} parent=11 // pred_region
          _
        $region28: #{bias_classifier_forward.1} parent=11 // pred_fallthru
          _
        // Predicated region
        $region29: #{bias_classifier_forward.1} parent=11 // pred_check
          %p588 = pneg %p514
        $region30: #{bias_classifier_forward.1} parent=11 // pred_check_branch
          %590 = sbr.rel (%p588) target = $region32
        $region31: #{bias_classifier_forward.1} parent=11 // pred_region
          %s592 = ssub.s32 1024, 1024
          %593 = vsyncadd [#allocation9], %s592
          %s594 = sshll.u32 [#allocation8], 4
          %s595 = int_to_ptr.vmem [resolvable:$true] %s594
          %600 = dma.hbm_to_vmem [thread:$0]  %s18, 1024, %s595, [#allocation9], 64, 64, 4
        $region32: #{bias_classifier_forward.1} parent=11 // pred_fallthru
          _
        // Predicated region
        $region33: #{bias_classifier_forward.1} parent=11 // pred_check
          %p601 = pneg %p535
        $region34: #{bias_classifier_forward.1} parent=11 // pred_check_branch
          %603 = sbr.rel (%p601) target = $region36
        $region35: #{bias_classifier_forward.1} parent=11 // pred_region
          _
        $region36: #{bias_classifier_forward.1} parent=11 // pred_fallthru
          _
      $region12: #{bias_classifier_forward.1} parent=5 // pred_fallthru
        _
      %p604 = scmp.lt.s32.totalorder %s33, 4
      // Predicated region
      $region37: #{bias_classifier_forward.1} parent=5 // pred_check
        %p605 = pneg %p604
      $region38: #{bias_classifier_forward.1} parent=5 // pred_check_branch
        %607 = sbr.rel (%p605) target = $region40
      $region39: #{bias_classifier_forward.1} parent=5 // pred_region
        // Predicated region
        $region41: #{bias_classifier_forward.1} parent=39 // pred_check
          %p608 = pneg %p65
        $region42: #{bias_classifier_forward.1} parent=39 // pred_check_branch
          %610 = sbr.rel (%p608) target = $region44
        $region43: #{bias_classifier_forward.1} parent=39 // pred_region
          %p611 = scmp.lt.s32.totalorder %s40, 1
          %s612 = scalar_select %p611, %s40, 1
          %s613 = smul.addr %s612, 8
          %s614 = scalar_lea.vmem %s0, %s613
        $region44: #{bias_classifier_forward.1} parent=39 // pred_fallthru
          _
        // Predicated region
        $region45: #{bias_classifier_forward.1} parent=39 // pred_check
          %p615 = pneg %p91
        $region46: #{bias_classifier_forward.1} parent=39 // pred_check_branch
          %617 = sbr.rel (%p615) target = $region48
        $region47: #{bias_classifier_forward.1} parent=39 // pred_region
          %p618 = scmp.lt.s32.totalorder %s40, 1
          %s619 = scalar_select %p618, %s40, 1
          %s620 = scalar_lea.vmem %s1, %s619
        $region48: #{bias_classifier_forward.1} parent=39 // pred_fallthru
          _
        // Predicated region
        $region49: #{bias_classifier_forward.1} parent=39 // pred_check
          %p621 = pneg %p159
        $region50: #{bias_classifier_forward.1} parent=39 // pred_check_branch
          %623 = sbr.rel (%p621) target = $region52
        $region51: #{bias_classifier_forward.1} parent=39 // pred_region
          %s624 = sand.u32 %s149, 1
          %s625 = scalar_lea.sflag [#allocation4], %s624
          %s626 = sand.u32 %s149, 1
          %s627 = smul.addr %s626, 192
          %s628 = scalar_lea.vmem [#allocation3], %s627
          %s630 = ssub.s32 3072, 3072
          %631 = vsyncadd %s625, %s630
          %s632 = smul.addr %s41, 48
          %s633 = smul.addr %s632, 64
          %s634 = scalar_lea.hbm %s4, %s633
          %s635 = sshll.u32 %s628, 4
          %s636 = int_to_ptr.vmem [resolvable:$true] %s635
          %641 = dma.hbm_to_vmem [thread:$0]  %s634, 3072, %s636, %s625, 192, 192, 12
        $region52: #{bias_classifier_forward.1} parent=39 // pred_fallthru
          _
        // Predicated region
        $region53: #{bias_classifier_forward.1} parent=39 // pred_check
          %p642 = pneg %p185
        $region54: #{bias_classifier_forward.1} parent=39 // pred_check_branch
          %644 = sbr.rel (%p642) target = $region56
        $region55: #{bias_classifier_forward.1} parent=39 // pred_region
          %p645 = scmp.lt.s32.totalorder %s41, 1
          %s646 = scalar_select %p645, %s41, 1
          %s647 = smul.addr %s646, 3
          %s648 = scalar_lea.vmem %s5, %s647
        $region56: #{bias_classifier_forward.1} parent=39 // pred_fallthru
          _
        // Predicated region
        $region57: #{bias_classifier_forward.1} parent=39 // pred_check
          %p649 = pneg %p211
        $region58: #{bias_classifier_forward.1} parent=39 // pred_check_branch
          %651 = sbr.rel (%p649) target = $region60
        $region59: #{bias_classifier_forward.1} parent=39 // pred_region
          %p652 = scmp.lt.s32.totalorder %s41, 1
          %s653 = scalar_select %p652, %s41, 1
          %s654 = smul.addr %s653, 16
          %s655 = smul.addr %s654, 4
          %s656 = scalar_lea.vmem %s6, %s655
        $region60: #{bias_classifier_forward.1} parent=39 // pred_fallthru
          _
        // Predicated region
        $region61: #{bias_classifier_forward.1} parent=39 // pred_check
          %p657 = pneg %p237
        $region62: #{bias_classifier_forward.1} parent=39 // pred_check_branch
          %659 = sbr.rel (%p657) target = $region64
        $region63: #{bias_classifier_forward.1} parent=39 // pred_region
          %p660 = scmp.lt.s32.totalorder %s41, 1
          %s661 = scalar_select %p660, %s41, 1
          %s662 = scalar_lea.vmem %s7, %s661
        $region64: #{bias_classifier_forward.1} parent=39 // pred_fallthru
          _
        // Predicated region
        $region65: #{bias_classifier_forward.1} parent=39 // pred_check
          %p663 = pneg %p263
        $region66: #{bias_classifier_forward.1} parent=39 // pred_check_branch
          %665 = sbr.rel (%p663) target = $region68
        $region67: #{bias_classifier_forward.1} parent=39 // pred_region
          %p666 = scmp.lt.s32.totalorder %s41, 1
          %s667 = scalar_select %p666, %s41, 1
          %s668 = scalar_lea.vmem %s8, %s667
        $region68: #{bias_classifier_forward.1} parent=39 // pred_fallthru
          _
        // Predicated region
        $region69: #{bias_classifier_forward.1} parent=39 // pred_check
          %p669 = pneg %p289
        $region70: #{bias_classifier_forward.1} parent=39 // pred_check_branch
          %671 = sbr.rel (%p669) target = $region72
        $region71: #{bias_classifier_forward.1} parent=39 // pred_region
          %p672 = scmp.lt.s32.totalorder %s41, 1
          %s673 = scalar_select %p672, %s41, 1
          %s674 = scalar_lea.vmem %s9, %s673
        $region72: #{bias_classifier_forward.1} parent=39 // pred_fallthru
          _
        // Predicated region
        $region73: #{bias_classifier_forward.1} parent=39 // pred_check
          %p675 = pneg %p315
        $region74: #{bias_classifier_forward.1} parent=39 // pred_check_branch
          %677 = sbr.rel (%p675) target = $region76
        $region75: #{bias_classifier_forward.1} parent=39 // pred_region
          %s678 = sand.u32 %s33, 1
          %s679 = scalar_lea.sflag [#allocation6], %s678
          %s680 = sand.u32 %s305, 1
          %s681 = smul.addr %s680, 128
          %s682 = scalar_lea.vmem [#allocation5], %s681
          %s684 = ssub.s32 2048, 2048
          %685 = vsyncadd %s679, %s684
          %s686 = smul.addr %s41, 32
          %s687 = smul.addr %s686, 64
          %s688 = scalar_lea.hbm %s10, %s687
          %s689 = sshll.u32 %s682, 4
          %s690 = int_to_ptr.vmem [resolvable:$true] %s689
          %695 = dma.hbm_to_vmem [thread:$0]  %s688, 2048, %s690, %s679, 128, 128, 8
        $region76: #{bias_classifier_forward.1} parent=39 // pred_fallthru
          _
        // Predicated region
        $region77: #{bias_classifier_forward.1} parent=39 // pred_check
          %p696 = pneg %p341
        $region78: #{bias_classifier_forward.1} parent=39 // pred_check_branch
          %698 = sbr.rel (%p696) target = $region80
        $region79: #{bias_classifier_forward.1} parent=39 // pred_region
          %p699 = scmp.lt.s32.totalorder %s41, 1
          %s700 = scalar_select %p699, %s41, 1
          %s701 = smul.addr %s700, 2
          %s702 = scalar_lea.vmem %s11, %s701
        $region80: #{bias_classifier_forward.1} parent=39 // pred_fallthru
          _
        // Predicated region
        $region81: #{bias_classifier_forward.1} parent=39 // pred_check
          %p703 = pneg %p367
        $region82: #{bias_classifier_forward.1} parent=39 // pred_check_branch
          %705 = sbr.rel (%p703) target = $region84
        $region83: #{bias_classifier_forward.1} parent=39 // pred_region
          %s706 = sand.u32 %s33, 1
          %s707 = scalar_lea.sflag [#allocation6], %s706
          %s708 = sand.u32 %s357, 1
          %s709 = smul.addr %s708, 128
          %s710 = scalar_lea.vmem [#allocation7], %s709
          %s712 = ssub.s32 2048, 2048
          %713 = vsyncadd %s707, %s712
          %s714 = smul.addr %s41, 32
          %s715 = smul.addr %s714, 64
          %s716 = scalar_lea.hbm %s12, %s715
          %s717 = sshll.u32 %s710, 4
          %s718 = int_to_ptr.vmem [resolvable:$true] %s717
          %723 = dma.hbm_to_vmem [thread:$0]  %s716, 2048, %s718, %s707, 64, 64, 4
        $region84: #{bias_classifier_forward.1} parent=39 // pred_fallthru
          _
        // Predicated region
        $region85: #{bias_classifier_forward.1} parent=39 // pred_check
          %p724 = pneg %p393
        $region86: #{bias_classifier_forward.1} parent=39 // pred_check_branch
          %726 = sbr.rel (%p724) target = $region88
        $region87: #{bias_classifier_forward.1} parent=39 // pred_region
          %p727 = scmp.lt.s32.totalorder %s41, 1
          %s728 = scalar_select %p727, %s41, 1
          %s729 = scalar_lea.vmem %s13, %s728
        $region88: #{bias_classifier_forward.1} parent=39 // pred_fallthru
          _
        // Predicated region
        $region89: #{bias_classifier_forward.1} parent=39 // pred_check
          %p730 = pneg %p419
        $region90: #{bias_classifier_forward.1} parent=39 // pred_check_branch
          %732 = sbr.rel (%p730) target = $region92
        $region91: #{bias_classifier_forward.1} parent=39 // pred_region
          %p733 = scmp.lt.s32.totalorder %s41, 1
          %s734 = scalar_select %p733, %s41, 1
          %s735 = scalar_lea.vmem %s14, %s734
        $region92: #{bias_classifier_forward.1} parent=39 // pred_fallthru
          _
        // Predicated region
        $region93: #{bias_classifier_forward.1} parent=39 // pred_check
          %p736 = pneg %p445
        $region94: #{bias_classifier_forward.1} parent=39 // pred_check_branch
          %738 = sbr.rel (%p736) target = $region96
        $region95: #{bias_classifier_forward.1} parent=39 // pred_region
          %p739 = scmp.lt.s32.totalorder %s41, 1
          %s740 = scalar_select %p739, %s41, 1
          %s741 = scalar_lea.vmem %s15, %s740
        $region96: #{bias_classifier_forward.1} parent=39 // pred_fallthru
          _
      $region40: #{bias_classifier_forward.1} parent=5 // pred_fallthru
        _
      %p742 = scmp.le.s32.totalorder 1, %s33
      %p743 = scmp.lt.s32.totalorder %s33, 5
      %p744 = pnand %p742, %p743
      %p745 = pneg %p744
      // Predicated region
      $region97: #{bias_classifier_forward.1} parent=5 // pred_check
        _
      $region98: #{bias_classifier_forward.1} parent=5 // pred_check_branch
        %747 = sbr.rel (%p744) target = $region100
      $region99: #{bias_classifier_forward.1} parent=5 // pred_region
        %s748 = ssub.s32 %s33, 1
        %s749 = sand.u32 %s152, 1
        %s750 = scalar_lea.sflag [#allocation4], %s749
        %s751 = sand.u32 %s152, 1
        %s752 = smul.addr %s751, 192
        %s753 = scalar_lea.vmem [#allocation3], %s752
        // Predicated region
        $region101: #{bias_classifier_forward.1} parent=99 // pred_check
          %p754 = pneg %p165
        $region102: #{bias_classifier_forward.1} parent=99 // pred_check_branch
          %756 = sbr.rel (%p754) target = $region104
        $region103: #{bias_classifier_forward.1} parent=99 // pred_region
          %757 = dma.done %s750, 3072
        $region104: #{bias_classifier_forward.1} parent=99 // pred_fallthru
          _
        %s758 = sand.u32 %s38, 1
        %s759 = scalar_lea.sflag [#allocation6], %s758
        %s760 = sand.u32 %s308, 1
        %s761 = smul.addr %s760, 128
        %s762 = scalar_lea.vmem [#allocation5], %s761
        // Predicated region
        $region105: #{bias_classifier_forward.1} parent=99 // pred_check
          %p763 = pneg %p321
        $region106: #{bias_classifier_forward.1} parent=99 // pred_check_branch
          %765 = sbr.rel (%p763) target = $region108
        $region107: #{bias_classifier_forward.1} parent=99 // pred_region
          %766 = dma.done %s759, 2048
        $region108: #{bias_classifier_forward.1} parent=99 // pred_fallthru
          _
        %s767 = sand.u32 %s38, 1
        %s768 = scalar_lea.sflag [#allocation6], %s767
        %s769 = sand.u32 %s360, 1
        %s770 = smul.addr %s769, 128
        %s771 = scalar_lea.vmem [#allocation7], %s770
        // Predicated region
        $region109: #{bias_classifier_forward.1} parent=99 // pred_check
          %p772 = pneg %p373
        $region110: #{bias_classifier_forward.1} parent=99 // pred_check_branch
          %774 = sbr.rel (%p772) target = $region112
        $region111: #{bias_classifier_forward.1} parent=99 // pred_region
          %775 = dma.done %s768, 2048
        $region112: #{bias_classifier_forward.1} parent=99 // pred_fallthru
          _
        // Predicated region
        $region113: #{bias_classifier_forward.1} parent=99 // pred_check
          %p776 = pneg %p514
        $region114: #{bias_classifier_forward.1} parent=99 // pred_check_branch
          %778 = sbr.rel (%p776) target = $region116
        $region115: #{bias_classifier_forward.1} parent=99 // pred_region
          %779 = dma.done [#allocation9], 1024
        $region116: #{bias_classifier_forward.1} parent=99 // pred_fallthru
          _
        %p780 = scmp.lt.s32.totalorder %s42, 1
        %s781 = scalar_select %p780, %s42, 1
        %s782 = smul.addr %s781, 8
        %s783 = scalar_lea.vmem %s0, %s782
        %p784 = pneg %p71
        %p785 = pneg %p68
        %p786 = scmp.lt.s32.totalorder %s42, 1
        %s787 = scalar_select %p786, %s42, 1
        %s788 = scalar_lea.vmem %s1, %s787
        %p789 = pneg %p97
        %p790 = pneg %p94
        %p791 = pneg %p118
        %p792 = pneg %p115
        %p793 = pneg %p139
        %p794 = pneg %p136
        %s795 = sand.u32 %s152, 1
        %s796 = scalar_lea.sflag [#allocation4], %s795
        %s797 = sand.u32 %s152, 1
        %s798 = smul.addr %s797, 192
        %s799 = scalar_lea.vmem [#allocation3], %s798
        %p800 = pneg %p165
        %p801 = pneg %p162
        %p802 = scmp.lt.s32.totalorder %s43, 1
        %s803 = scalar_select %p802, %s43, 1
        %s804 = smul.addr %s803, 3
        %s805 = scalar_lea.vmem %s5, %s804
        %p806 = pneg %p191
        %p807 = pneg %p188
        %p808 = scmp.lt.s32.totalorder %s43, 1
        %s809 = scalar_select %p808, %s43, 1
        %s810 = smul.addr %s809, 16
        %s811 = smul.addr %s810, 4
        %s812 = scalar_lea.vmem %s6, %s811
        %p813 = pneg %p217
        %p814 = pneg %p214
        %p815 = scmp.lt.s32.totalorder %s43, 1
        %s816 = scalar_select %p815, %s43, 1
        %s817 = scalar_lea.vmem %s7, %s816
        %p818 = pneg %p243
        %p819 = pneg %p240
        %p820 = scmp.lt.s32.totalorder %s43, 1
        %s821 = scalar_select %p820, %s43, 1
        %s822 = scalar_lea.vmem %s8, %s821
        %p823 = pneg %p269
        %p824 = pneg %p266
        %p825 = scmp.lt.s32.totalorder %s43, 1
        %s826 = scalar_select %p825, %s43, 1
        %s827 = scalar_lea.vmem %s9, %s826
        %p828 = pneg %p295
        %p829 = pneg %p292
        %s830 = sand.u32 %s38, 1
        %s831 = scalar_lea.sflag [#allocation6], %s830
        %s832 = sand.u32 %s308, 1
        %s833 = smul.addr %s832, 128
        %s834 = scalar_lea.vmem [#allocation5], %s833
        %p835 = pneg %p321
        %p836 = pneg %p318
        %p837 = scmp.lt.s32.totalorder %s43, 1
        %s838 = scalar_select %p837, %s43, 1
        %s839 = smul.addr %s838, 2
        %s840 = scalar_lea.vmem %s11, %s839
        %p841 = pneg %p347
        %p842 = pneg %p344
        %s843 = sand.u32 %s38, 1
        %s844 = scalar_lea.sflag [#allocation6], %s843
        %s845 = sand.u32 %s360, 1
        %s846 = smul.addr %s845, 128
        %s847 = scalar_lea.vmem [#allocation7], %s846
        %p848 = pneg %p373
        %p849 = pneg %p370
        %p850 = scmp.lt.s32.totalorder %s43, 1
        %s851 = scalar_select %p850, %s43, 1
        %s852 = scalar_lea.vmem %s13, %s851
        %p853 = pneg %p399
        %p854 = pneg %p396
        %p855 = scmp.lt.s32.totalorder %s43, 1
        %s856 = scalar_select %p855, %s43, 1
        %s857 = scalar_lea.vmem %s14, %s856
        %p858 = pneg %p425
        %p859 = pneg %p422
        %p860 = scmp.lt.s32.totalorder %s43, 1
        %s861 = scalar_select %p860, %s43, 1
        %s862 = scalar_lea.vmem %s15, %s861
        %p863 = pneg %p451
        %p864 = pneg %p448
        %p865 = pneg %p472
        %p866 = pneg %p469
        %p867 = pneg %p493
        %p868 = pneg %p490
        %p869 = pneg %p514
        %p870 = pneg %p511
        %p871 = pneg %p535
        %p872 = pneg %p532
        %p873 = pneg %p561
        %p874 = pneg %p558
        %p875 = scmp.lt.s32.totalorder %s42, 1
        %s876 = scalar_select %p875, %s42, 1
        %s877 = smul.addr %s876, 8
        %s878 = scalar_lea.vmem %s20, %s877
        %p879 = scmp.lt.s32.totalorder %s42, 1
        %s880 = scalar_select %p879, %s42, 1
        %s881 = smul.addr %s880, 8
        %s882 = scalar_lea.vmem %s0, %s881
        %p883 = scmp.lt.s32.totalorder %s42, 1
        %s884 = scalar_select %p883, %s42, 1
        %s885 = scalar_lea.vmem %s1, %s884
        %p886 = scmp.lt.s32.totalorder %s43, 1
        %s887 = scalar_select %p886, %s43, 1
        %s888 = smul.addr %s887, 3
        %s889 = scalar_lea.vmem %s5, %s888
        %p890 = scmp.lt.s32.totalorder %s43, 1
        %s891 = scalar_select %p890, %s43, 1
        %s892 = smul.addr %s891, 16
        %s893 = smul.addr %s892, 4
        %s894 = scalar_lea.vmem %s6, %s893
        %p895 = scmp.lt.s32.totalorder %s43, 1
        %s896 = scalar_select %p895, %s43, 1
        %s897 = scalar_lea.vmem %s7, %s896
        %p898 = scmp.lt.s32.totalorder %s43, 1
        %s899 = scalar_select %p898, %s43, 1
        %s900 = scalar_lea.vmem %s8, %s899
        %p901 = scmp.lt.s32.totalorder %s43, 1
        %s902 = scalar_select %p901, %s43, 1
        %s903 = scalar_lea.vmem %s9, %s902
        %p904 = scmp.lt.s32.totalorder %s43, 1
        %s905 = scalar_select %p904, %s43, 1
        %s906 = smul.addr %s905, 2
        %s907 = scalar_lea.vmem %s11, %s906
        %p908 = scmp.lt.s32.totalorder %s43, 1
        %s909 = scalar_select %p908, %s43, 1
        %s910 = scalar_lea.vmem %s13, %s909
        %p911 = scmp.lt.s32.totalorder %s43, 1
        %s912 = scalar_select %p911, %s43, 1
        %s913 = scalar_lea.vmem %s14, %s912
        %p914 = scmp.lt.s32.totalorder %s43, 1
        %s915 = scalar_select %p914, %s43, 1
        %s916 = scalar_lea.vmem %s15, %s915
        %p917 = scmp.lt.s32.totalorder %s42, 1
        %s918 = scalar_select %p917, %s42, 1
        %s919 = smul.addr %s918, 8
        %s920 = scalar_lea.vmem %s20, %s919
        %p922 = scmp.eq.s32.totalorder %s43, 0
        // Predicated region
        $region117: #{bias_classifier_forward.1} parent=99 // pred_check
          %p923 = pneg %p922
        $region118: #{bias_classifier_forward.1} parent=99 // pred_check_branch
          %925 = sbr.rel (%p923) target = $region120
        $region119: #{bias_classifier_forward.1} parent=99 // pred_region
          %v926 = vld [vmem:[%s882] sm:$0xff]
          %v927 = vld [vmem:[%s2] sm:$0x1]
          %v928 = vld [vmem:[%s3] sm:$0x1]
          %929 = vadd.xlane.f32.xlu0 %v926
          %v930 = vpop.xlane.xlu0 %929
          %v931 = vrcp.pop 128.0
          %v932 = vmul.f32 %v930, %v931
          %v933 = vsub.f32 %v926, %v932
          %v934 = vmul.f32 %v933, %v933
          %935 = vadd.xlane.f32.xlu0 %v934
          %v936 = vpop.xlane.xlu0 %935
          %v937 = vmul.f32 %v936, %v931
          %v938 = vadd.f32 %v937, 1e-12
          %v939 = vrsqrt.pop %v938
          %v940 = vmul.f32 %v933, %v939
          %v942 = vlaneseq
          %v943 = vshrl.u32 %v942, 7
          %v944 = vsub.s32 0, %v943
          %v945 = vrot.slane %v927, %v944
          %v947 = vmul.f32 %v940, %v945
          %v949 = vlaneseq
          %v950 = vshrl.u32 %v949, 7
          %v951 = vsub.s32 0, %v950
          %v952 = vrot.slane %v928, %v951
          %v954 = vadd.f32 %v947, %v952
          %955 = vst [vmem:[#allocation2] sm:$0xff] %v954
        $region120: #{bias_classifier_forward.1} parent=99 // pred_fallthru
          _
        %v956 = vld [vmem:[#allocation2] sm:$0xff]
        %v957 = vpack.c.bf16 %v956, %v956
        %v958 = vld [vmem:[%s753] sm:$0xff]
        %v959 = vld [vmem:[%s753 + $0x8] sm:$0xf]
        %v960 = vld [vmem:[%s753 + $0xc] sm:$0xff]
        %v961 = vld [vmem:[%s753 + $0x14] sm:$0xf]
        %v962 = vld [vmem:[%s753 + $0x18] sm:$0xff]
        %v963 = vld [vmem:[%s753 + $0x20] sm:$0xf]
        %v964 = vld [vmem:[%s753 + $0x24] sm:$0xff]
        %v965 = vld [vmem:[%s753 + $0x2c] sm:$0xf]
        %v966 = vld [vmem:[%s753 + $0x30] sm:$0xff]
        %v967 = vld [vmem:[%s753 + $0x38] sm:$0xf]
        %v968 = vld [vmem:[%s753 + $0x3c] sm:$0xff]
        %v969 = vld [vmem:[%s753 + $0x44] sm:$0xf]
        %v970 = vld [vmem:[%s753 + $0x48] sm:$0xff]
        %v971 = vld [vmem:[%s753 + $0x50] sm:$0xf]
        %v972 = vld [vmem:[%s753 + $0x54] sm:$0xff]
        %v973 = vld [vmem:[%s753 + $0x5c] sm:$0xf]
        %v974 = vld [vmem:[%s753 + $0x60] sm:$0xff]
        %v975 = vld [vmem:[%s753 + $0x68] sm:$0xf]
        %v976 = vld [vmem:[%s753 + $0x6c] sm:$0xff]
        %v977 = vld [vmem:[%s753 + $0x74] sm:$0xf]
        %v978 = vld [vmem:[%s753 + $0x78] sm:$0xff]
        %v979 = vld [vmem:[%s753 + $0x80] sm:$0xf]
        %v980 = vld [vmem:[%s753 + $0x84] sm:$0xff]
        %v981 = vld [vmem:[%s753 + $0x8c] sm:$0xf]
        %v982 = vld [vmem:[%s753 + $0x90] sm:$0xff]
        %v983 = vld [vmem:[%s753 + $0x98] sm:$0xf]
        %v984 = vld [vmem:[%s753 + $0x9c] sm:$0xff]
        %v985 = vld [vmem:[%s753 + $0xa4] sm:$0xf]
        %v986 = vld [vmem:[%s753 + $0xa8] sm:$0xff]
        %v987 = vld [vmem:[%s753 + $0xb0] sm:$0xf]
        %v988 = vld [vmem:[%s753 + $0xb4] sm:$0xff]
        %v989 = vld [vmem:[%s753 + $0xbc] sm:$0xf]
        %v990 = vld [vmem:[%s889] sm:$0x7]
        %v992 = vlaneseq
        %v993 = vshrl.u32 %v992, 7
        %v994 = vsub.s32 0, %v993
        %v995 = vrot.slane %v990, %v994
        %v996 = vlaneseq
        %v997 = vshrl.u32 %v996, 7
        %v998 = vsub.s32 1, %v997
        %v999 = vrot.slane %v990, %v998
        %v1000 = vlaneseq
        %v1001 = vshrl.u32 %v1000, 7
        %v1002 = vsub.s32 2, %v1001
        %v1003 = vrot.slane %v990, %v1002
        %v1039 = vunpack.c.l.b16 %v958
        %v1040 = vunpack.c.h.b16 %v958
        %v1041 = vunpack.c.l.b16 %v959
        %v1042 = vunpack.c.l.b16 %v960
        %v1043 = vunpack.c.h.b16 %v960
        %v1044 = vunpack.c.l.b16 %v961
        %v1045 = vunpack.c.l.b16 %v962
        %v1046 = vunpack.c.h.b16 %v962
        %v1047 = vunpack.c.l.b16 %v963
        %v1048 = vunpack.c.l.b16 %v964
        %v1049 = vunpack.c.h.b16 %v964
        %v1050 = vunpack.c.l.b16 %v965
        %v1051 = vunpack.c.l.b16 %v966
        %v1052 = vunpack.c.h.b16 %v966
        %v1053 = vunpack.c.l.b16 %v967
        %v1054 = vunpack.c.l.b16 %v968
        %v1055 = vunpack.c.h.b16 %v968
        %v1056 = vunpack.c.l.b16 %v969
        %v1057 = vunpack.c.l.b16 %v970
        %v1058 = vunpack.c.h.b16 %v970
        %v1059 = vunpack.c.l.b16 %v971
        %v1060 = vunpack.c.l.b16 %v972
        %v1061 = vunpack.c.h.b16 %v972
        %v1062 = vunpack.c.l.b16 %v973
        %v1063 = vunpack.c.l.b16 %v974
        %v1064 = vunpack.c.h.b16 %v974
        %v1065 = vunpack.c.l.b16 %v975
        %v1066 = vunpack.c.l.b16 %v976
        %v1067 = vunpack.c.h.b16 %v976
        %v1068 = vunpack.c.l.b16 %v977
        %v1069 = vunpack.c.l.b16 %v978
        %v1070 = vunpack.c.h.b16 %v978
        %v1071 = vunpack.c.l.b16 %v979
        %v1072 = vunpack.c.l.b16 %v980
        %v1073 = vunpack.c.h.b16 %v980
        %v1074 = vunpack.c.l.b16 %v981
        %v1075 = vunpack.c.l.b16 %v982
        %v1076 = vunpack.c.h.b16 %v982
        %v1077 = vunpack.c.l.b16 %v983
        %v1078 = vunpack.c.l.b16 %v984
        %v1079 = vunpack.c.h.b16 %v984
        %v1080 = vunpack.c.l.b16 %v985
        %v1081 = vunpack.c.l.b16 %v986
        %v1082 = vunpack.c.h.b16 %v986
        %v1083 = vunpack.c.l.b16 %v987
        %v1084 = vunpack.c.l.b16 %v988
        %v1085 = vunpack.c.h.b16 %v988
        %v1086 = vunpack.c.l.b16 %v989
        %v1087 = vpack.c.b16 %v1042, %v1039
        %v1088 = vpack.c.b16 %v1043, %v1040
        %v1089 = vpack.c.b16 %v1044, %v1041
        %v1090 = vpack.c.b16 %v1048, %v1045
        %v1091 = vpack.c.b16 %v1049, %v1046
        %v1092 = vpack.c.b16 %v1050, %v1047
        %v1093 = vpack.c.b16 %v1054, %v1051
        %v1094 = vpack.c.b16 %v1055, %v1052
        %v1095 = vpack.c.b16 %v1056, %v1053
        %v1096 = vpack.c.b16 %v1060, %v1057
        %v1097 = vpack.c.b16 %v1061, %v1058
        %v1098 = vpack.c.b16 %v1062, %v1059
        %v1099 = vpack.c.b16 %v1066, %v1063
        %v1100 = vpack.c.b16 %v1067, %v1064
        %v1101 = vpack.c.b16 %v1068, %v1065
        %v1102 = vpack.c.b16 %v1072, %v1069
        %v1103 = vpack.c.b16 %v1073, %v1070
        %v1104 = vpack.c.b16 %v1074, %v1071
        %v1105 = vpack.c.b16 %v1078, %v1075
        %v1106 = vpack.c.b16 %v1079, %v1076
        %v1107 = vpack.c.b16 %v1080, %v1077
        %v1108 = vpack.c.b16 %v1084, %v1081
        %v1109 = vpack.c.b16 %v1085, %v1082
        %v1110 = vpack.c.b16 %v1086, %v1083
        %1135 = vmatprep.subr.bf16.mxu0 %v1109
        %1136 = vmatpush1.bf16.msra.mxu0 %v1108
        %1137 = vmatprep.subr.bf16.mxu0 %v1106
        %1138 = vmatpush1.bf16.msra.mxu0 %v1105
        %1139 = vmatprep.subr.bf16.mxu0 %v1103
        %1140 = vmatpush1.bf16.msra.mxu0 %v1102
        %1141 = vmatprep.subr.bf16.mxu0 %v1100
        %1142 = vmatpush1.bf16.msra.mxu0 %v1099
        %1143 = vmatprep.subr.bf16.mxu0 %v1097
        %1144 = vmatpush1.bf16.msra.mxu0 %v1096
        %1145 = vmatprep.subr.bf16.mxu0 %v1094
        %1146 = vmatpush1.bf16.msra.mxu0 %v1093
        %1147 = vmatprep.subr.bf16.mxu0 %v1091
        %1148 = vmatpush1.bf16.msra.mxu0 %v1090
        %1149 = vmatprep.subr.bf16.mxu0 %v1088
        %1150 = vmatpush1.bf16.msra.mxu0 %v1087
        %1151 = vmatprep.subr.bf16.mxu0 0
        %1152 = vmatpush2.bf16.msra.mxu0 0
        %1153 = vmatprep.subr.bf16.mxu0 0
        %1154 = vmatpush2.bf16.msra.mxu0 0
        %1155 = vmatprep.subr.bf16.mxu0 0
        %1156 = vmatpush2.bf16.msra.mxu0 0
        %1157 = vmatprep.subr.bf16.mxu0 0
        %1158 = vmatpush2.bf16.msra.mxu0 0
        %1159 = vmatprep.subr.bf16.mxu0 0
        %1160 = vmatpush2.bf16.msra.mxu0 0
        %1161 = vmatprep.subr.bf16.mxu0 0
        %1162 = vmatpush2.bf16.msra.mxu0 0
        %1163 = vmatprep.subr.bf16.mxu0 0
        %1164 = vmatpush2.bf16.msra.mxu0 0
        %1165 = vmatprep.subr.bf16.mxu0 0
        %1166 = vmatpush2.bf16.msra.mxu0 0
        %1167 = vmatprep.mubr.bf16.mxu0 0
        %1168 = vmatmul.mubr.bf16.gmra.mxu0 %v957
        %v1169 = vpop.f32.mrf.mxu0
        %v1170 = vadd.f32 %v995, %v1169
        %v1171 = vpop.f32.mrf.mxu0
        %v1172 = vadd.f32 %v999, %v1171
        %v1173 = vpop.f32.mrf.mxu0
        %v1174 = vpop.f32.mrf.mxu0
        %1175 = vdwg.mxu0
        %1176 = vmatprep.subr.bf16.mxu0 0
        %1177 = vmatpush1.bf16.msra.mxu0 %v1110
        %1178 = vmatprep.subr.bf16.mxu0 0
        %1179 = vmatpush1.bf16.msra.mxu0 %v1107
        %1180 = vmatprep.subr.bf16.mxu0 0
        %1181 = vmatpush1.bf16.msra.mxu0 %v1104
        %1182 = vmatprep.subr.bf16.mxu0 0
        %1183 = vmatpush1.bf16.msra.mxu0 %v1101
        %1184 = vmatprep.subr.bf16.mxu0 0
        %1185 = vmatpush1.bf16.msra.mxu0 %v1098
        %1186 = vmatprep.subr.bf16.mxu0 0
        %1187 = vmatpush1.bf16.msra.mxu0 %v1095
        %1188 = vmatprep.subr.bf16.mxu0 0
        %1189 = vmatpush1.bf16.msra.mxu0 %v1092
        %1190 = vmatprep.subr.bf16.mxu0 0
        %1191 = vmatpush1.bf16.msra.mxu0 %v1089
        %1192 = vmatprep.subr.bf16.mxu0 0
        %1193 = vmatpush2.bf16.msra.mxu0 0
        %1194 = vmatprep.subr.bf16.mxu0 0
        %1195 = vmatpush2.bf16.msra.mxu0 0
        %1196 = vmatprep.subr.bf16.mxu0 0
        %1197 = vmatpush2.bf16.msra.mxu0 0
        %1198 = vmatprep.subr.bf16.mxu0 0
        %1199 = vmatpush2.bf16.msra.mxu0 0
        %1200 = vmatprep.subr.bf16.mxu0 0
        %1201 = vmatpush2.bf16.msra.mxu0 0
        %1202 = vmatprep.subr.bf16.mxu0 0
        %1203 = vmatpush2.bf16.msra.mxu0 0
        %1204 = vmatprep.subr.bf16.mxu0 0
        %1205 = vmatpush2.bf16.msra.mxu0 0
        %1206 = vmatprep.subr.bf16.mxu0 0
        %1207 = vmatpush2.bf16.msra.mxu0 0
        %1208 = vmatprep.mubr.bf16.mxu0 0
        %1209 = vmatmul.mubr.bf16.gmra.mxu0 %v957
        %v1210 = vpop.f32.mrf.mxu0
        %v1211 = vadd.f32 %v1003, %v1210
        %v1212 = vpop.f32.mrf.mxu0
        %v1213 = vpop.f32.mrf.mxu0
        %v1214 = vpop.f32.mrf.mxu0
        %1215 = vdwg.mxu0
        %v1216 = vld [vmem:[%s885] sm:$0x1]
        %v1217 = vpack.c.bf16 %v1170, %v1170
        %v1218 = vpack.c.bf16 %v1172, %v1172
        %v1219 = vpack.c.bf16 %v1211, %v1211
        %vm1220 = vcmask 261120
        %v1222 = vsel %vm1220, %v1217, 0
        %v1225 = vsel %vm1220, %v1218, 0
        %1227 = vmatprep.subr.bf16.mxu0 0
        %1228 = vmatpush1.bf16.xpose.msra.mxu0 0
        %1229 = vmatprep.subr.bf16.mxu0 0
        %1230 = vmatpush1.bf16.xpose.msra.mxu0 0
        %1231 = vmatprep.subr.bf16.mxu0 0
        %1232 = vmatpush1.bf16.xpose.msra.mxu0 0
        %1233 = vmatprep.subr.bf16.mxu0 0
        %1234 = vmatpush1.bf16.xpose.msra.mxu0 0
        %1235 = vmatprep.subr.bf16.mxu0 0
        %1236 = vmatpush1.bf16.xpose.msra.mxu0 0
        %1237 = vmatprep.subr.bf16.mxu0 0
        %1238 = vmatpush1.bf16.xpose.msra.mxu0 0
        %1239 = vmatprep.subr.bf16.mxu0 0
        %1240 = vmatpush1.bf16.xpose.msra.mxu0 0
        %1241 = vmatprep.subr.bf16.mxu0 0
        %1242 = vmatpush1.bf16.xpose.msra.mxu0 %v1225
        %1243 = vmatprep.subr.bf16.mxu0 0
        %1244 = vmatpush2.bf16.xpose.msra.mxu0 0
        %1245 = vmatprep.subr.bf16.mxu0 0
        %1246 = vmatpush2.bf16.xpose.msra.mxu0 0
        %1247 = vmatprep.subr.bf16.mxu0 0
        %1248 = vmatpush2.bf16.xpose.msra.mxu0 0
        %1249 = vmatprep.subr.bf16.mxu0 0
        %1250 = vmatpush2.bf16.xpose.msra.mxu0 0
        %1251 = vmatprep.subr.bf16.mxu0 0
        %1252 = vmatpush2.bf16.xpose.msra.mxu0 0
        %1253 = vmatprep.subr.bf16.mxu0 0
        %1254 = vmatpush2.bf16.xpose.msra.mxu0 0
        %1255 = vmatprep.subr.bf16.mxu0 0
        %1256 = vmatpush2.bf16.xpose.msra.mxu0 0
        %1257 = vmatprep.subr.bf16.mxu0 0
        %1258 = vmatpush2.bf16.xpose.msra.mxu0 0
        %1259 = vmatprep.mubr.bf16.mxu0 0
        %1260 = vmatmul.mubr.bf16.gmra.mxu0 %v1222
        %v1261 = vpop.f32.mrf.mxu0
        %v1262 = vadd.f32 0.0, %v1261
        %v1263 = vpop.f32.mrf.mxu0
        %v1264 = vpop.f32.mrf.mxu0
        %v1265 = vpop.f32.mrf.mxu0
        %1266 = vdwg.mxu0
        %v1267 = vmul.f32 %v1262, 0.17677669
        %v1269 = vlaneseq
        %v1270 = vshrl.u32 %v1269, 7
        %v1271 = vsub.s32 0, %v1270
        %v1272 = vrot.slane %v1216, %v1271
        %v1274 = vadd.f32 %v1267, %v1272
        %vm1275 = vcmask 64512
        %v1276 = vsel %vm1275, %v1274, -inf
        %1277 = vmax.xlane.f32.xlu0 %v1276
        %v1278 = vpop.xlane.xlu0 %1277
        %v1279 = vsub.f32 %v1274, %v1278
        %v1280 = vmul.f32 %v1279, 1.442695
        %v1281 = vpow.pop %v1280
        %v1282 = vsel %vm1275, %v1281, 0.0
        %1283 = vadd.xlane.f32.xlu0 %v1282
        %v1284 = vpop.xlane.xlu0 %1283
        %v1285 = vrcp.pop %v1284
        %v1286 = vmul.f32 %v1281, %v1285
        %v1287 = vpack.c.bf16 %v1286, %v1286
        %v1289 = vsel %vm1275, %v1287, 0
        %vm1291 = vcmask 1043456
        %v1293 = vsel %vm1291, %v1219, 0
        %1295 = vmatprep.subr.bf16.mxu0 0
        %1296 = vmatpush1.bf16.msra.mxu0 0
        %1297 = vmatprep.subr.bf16.mxu0 0
        %1298 = vmatpush1.bf16.msra.mxu0 0
        %1299 = vmatprep.subr.bf16.mxu0 0
        %1300 = vmatpush1.bf16.msra.mxu0 0
        %1301 = vmatprep.subr.bf16.mxu0 0
        %1302 = vmatpush1.bf16.msra.mxu0 0
        %1303 = vmatprep.subr.bf16.mxu0 0
        %1304 = vmatpush1.bf16.msra.mxu0 0
        %1305 = vmatprep.subr.bf16.mxu0 0
        %1306 = vmatpush1.bf16.msra.mxu0 0
        %1307 = vmatprep.subr.bf16.mxu0 0
        %1308 = vmatpush1.bf16.msra.mxu0 0
        %1309 = vmatprep.subr.bf16.mxu0 0
        %1310 = vmatpush1.bf16.msra.mxu0 %v1293
        %1311 = vmatprep.subr.bf16.mxu0 0
        %1312 = vmatpush2.bf16.msra.mxu0 0
        %1313 = vmatprep.subr.bf16.mxu0 0
        %1314 = vmatpush2.bf16.msra.mxu0 0
        %1315 = vmatprep.subr.bf16.mxu0 0
        %1316 = vmatpush2.bf16.msra.mxu0 0
        %1317 = vmatprep.subr.bf16.mxu0 0
        %1318 = vmatpush2.bf16.msra.mxu0 0
        %1319 = vmatprep.subr.bf16.mxu0 0
        %1320 = vmatpush2.bf16.msra.mxu0 0
        %1321 = vmatprep.subr.bf16.mxu0 0
        %1322 = vmatpush2.bf16.msra.mxu0 0
        %1323 = vmatprep.subr.bf16.mxu0 0
        %1324 = vmatpush2.bf16.msra.mxu0 0
        %1325 = vmatprep.subr.bf16.mxu0 0
        %1326 = vmatpush2.bf16.msra.mxu0 0
        %1327 = vmatprep.mubr.bf16.mxu0 0
        %1328 = vmatmul.mubr.bf16.gmra.mxu0 %v1289
        %v1329 = vpop.f32.mrf.mxu0
        %v1330 = vadd.f32 0.0, %v1329
        %v1331 = vpop.f32.mrf.mxu0
        %v1332 = vpop.f32.mrf.mxu0
        %v1333 = vpop.f32.mrf.mxu0
        %1334 = vdwg.mxu0
        %1336 = vrot.lane.b32.xlu0 %v1217, 96
        %v1337 = vpop.permute.xlu0 %1336
        %1339 = vrot.lane.b32.xlu0 %v1218, 96
        %v1340 = vpop.permute.xlu0 %1339
        %v1342 = vsel %vm1220, %v1337, 0
        %v1345 = vsel %vm1220, %v1340, 0
        %1347 = vmatprep.subr.bf16.mxu0 0
        %1348 = vmatpush1.bf16.xpose.msra.mxu0 0
        %1349 = vmatprep.subr.bf16.mxu0 0
        %1350 = vmatpush1.bf16.xpose.msra.mxu0 0
        %1351 = vmatprep.subr.bf16.mxu0 0
        %1352 = vmatpush1.bf16.xpose.msra.mxu0 0
        %1353 = vmatprep.subr.bf16.mxu0 0
        %1354 = vmatpush1.bf16.xpose.msra.mxu0 0
        %1355 = vmatprep.subr.bf16.mxu0 0
        %1356 = vmatpush1.bf16.xpose.msra.mxu0 0
        %1357 = vmatprep.subr.bf16.mxu0 0
        %1358 = vmatpush1.bf16.xpose.msra.mxu0 0
        %1359 = vmatprep.subr.bf16.mxu0 0
        %1360 = vmatpush1.bf16.xpose.msra.mxu0 0
        %1361 = vmatprep.subr.bf16.mxu0 0
        %1362 = vmatpush1.bf16.xpose.msra.mxu0 %v1345
        %1363 = vmatprep.subr.bf16.mxu0 0
        %1364 = vmatpush2.bf16.xpose.msra.mxu0 0
        %1365 = vmatprep.subr.bf16.mxu0 0
        %1366 = vmatpush2.bf16.xpose.msra.mxu0 0
        %1367 = vmatprep.subr.bf16.mxu0 0
        %1368 = vmatpush2.bf16.xpose.msra.mxu0 0
        %1369 = vmatprep.subr.bf16.mxu0 0
        %1370 = vmatpush2.bf16.xpose.msra.mxu0 0
        %1371 = vmatprep.subr.bf16.mxu0 0
        %1372 = vmatpush2.bf16.xpose.msra.mxu0 0
        %1373 = vmatprep.subr.bf16.mxu0 0
        %1374 = vmatpush2.bf16.xpose.msra.mxu0 0
        %1375 = vmatprep.subr.bf16.mxu0 0
        %1376 = vmatpush2.bf16.xpose.msra.mxu0 0
        %1377 = vmatprep.subr.bf16.mxu0 0
        %1378 = vmatpush2.bf16.xpose.msra.mxu0 0
        %1379 = vmatprep.mubr.bf16.mxu0 0
        %1380 = vmatmul.mubr.bf16.gmra.mxu0 %v1342
        %v1381 = vpop.f32.mrf.mxu0
        %v1382 = vadd.f32 0.0, %v1381
        %v1383 = vpop.f32.mrf.mxu0
        %v1384 = vpop.f32.mrf.mxu0
        %v1385 = vpop.f32.mrf.mxu0
        %1386 = vdwg.mxu0
        %v1387 = vmul.f32 %v1382, 0.17677669
        %v1388 = vadd.f32 %v1387, %v1272
        %v1389 = vsel %vm1275, %v1388, -inf
        %1390 = vmax.xlane.f32.xlu0 %v1389
        %v1391 = vpop.xlane.xlu0 %1390
        %v1392 = vsub.f32 %v1388, %v1391
        %v1393 = vmul.f32 %v1392, 1.442695
        %v1394 = vpow.pop %v1393
        %v1395 = vsel %vm1275, %v1394, 0.0
        %1396 = vadd.xlane.f32.xlu0 %v1395
        %v1397 = vpop.xlane.xlu0 %1396
        %v1398 = vrcp.pop %v1397
        %v1399 = vmul.f32 %v1394, %v1398
        %v1400 = vpack.c.bf16 %v1399, %v1399
        %1402 = vrot.lane.b32.xlu0 %v1219, 96
        %v1403 = vpop.permute.xlu0 %1402
        %v1405 = vsel %vm1275, %v1400, 0
        %v1408 = vsel %vm1291, %v1403, 0
        %1410 = vmatprep.subr.bf16.mxu0 0
        %1411 = vmatpush1.bf16.msra.mxu0 0
        %1412 = vmatprep.subr.bf16.mxu0 0
        %1413 = vmatpush1.bf16.msra.mxu0 0
        %1414 = vmatprep.subr.bf16.mxu0 0
        %1415 = vmatpush1.bf16.msra.mxu0 0
        %1416 = vmatprep.subr.bf16.mxu0 0
        %1417 = vmatpush1.bf16.msra.mxu0 0
        %1418 = vmatprep.subr.bf16.mxu0 0
        %1419 = vmatpush1.bf16.msra.mxu0 0
        %1420 = vmatprep.subr.bf16.mxu0 0
        %1421 = vmatpush1.bf16.msra.mxu0 0
        %1422 = vmatprep.subr.bf16.mxu0 0
        %1423 = vmatpush1.bf16.msra.mxu0 0
        %1424 = vmatprep.subr.bf16.mxu0 0
        %1425 = vmatpush1.bf16.msra.mxu0 %v1408
        %1426 = vmatprep.subr.bf16.mxu0 0
        %1427 = vmatpush2.bf16.msra.mxu0 0
        %1428 = vmatprep.subr.bf16.mxu0 0
        %1429 = vmatpush2.bf16.msra.mxu0 0
        %1430 = vmatprep.subr.bf16.mxu0 0
        %1431 = vmatpush2.bf16.msra.mxu0 0
        %1432 = vmatprep.subr.bf16.mxu0 0
        %1433 = vmatpush2.bf16.msra.mxu0 0
        %1434 = vmatprep.subr.bf16.mxu0 0
        %1435 = vmatpush2.bf16.msra.mxu0 0
        %1436 = vmatprep.subr.bf16.mxu0 0
        %1437 = vmatpush2.bf16.msra.mxu0 0
        %1438 = vmatprep.subr.bf16.mxu0 0
        %1439 = vmatpush2.bf16.msra.mxu0 0
        %1440 = vmatprep.subr.bf16.mxu0 0
        %1441 = vmatpush2.bf16.msra.mxu0 0
        %1442 = vmatprep.mubr.bf16.mxu0 0
        %1443 = vmatmul.mubr.bf16.gmra.mxu0 %v1405
        %v1444 = vpop.f32.mrf.mxu0
        %v1445 = vadd.f32 0.0, %v1444
        %v1446 = vpop.f32.mrf.mxu0
        %v1447 = vpop.f32.mrf.mxu0
        %v1448 = vpop.f32.mrf.mxu0
        %1449 = vdwg.mxu0
        %1450 = vrot.lane.b32.xlu0 %v1217, 64
        %v1451 = vpop.permute.xlu0 %1450
        %1452 = vrot.lane.b32.xlu0 %v1218, 64
        %v1453 = vpop.permute.xlu0 %1452
        %v1455 = vsel %vm1220, %v1451, 0
        %v1458 = vsel %vm1220, %v1453, 0
        %1460 = vmatprep.subr.bf16.mxu0 0
        %1461 = vmatpush1.bf16.xpose.msra.mxu0 0
        %1462 = vmatprep.subr.bf16.mxu0 0
        %1463 = vmatpush1.bf16.xpose.msra.mxu0 0
        %1464 = vmatprep.subr.bf16.mxu0 0
        %1465 = vmatpush1.bf16.xpose.msra.mxu0 0
        %1466 = vmatprep.subr.bf16.mxu0 0
        %1467 = vmatpush1.bf16.xpose.msra.mxu0 0
        %1468 = vmatprep.subr.bf16.mxu0 0
        %1469 = vmatpush1.bf16.xpose.msra.mxu0 0
        %1470 = vmatprep.subr.bf16.mxu0 0
        %1471 = vmatpush1.bf16.xpose.msra.mxu0 0
        %1472 = vmatprep.subr.bf16.mxu0 0
        %1473 = vmatpush1.bf16.xpose.msra.mxu0 0
        %1474 = vmatprep.subr.bf16.mxu0 0
        %1475 = vmatpush1.bf16.xpose.msra.mxu0 %v1458
        %1476 = vmatprep.subr.bf16.mxu0 0
        %1477 = vmatpush2.bf16.xpose.msra.mxu0 0
        %1478 = vmatprep.subr.bf16.mxu0 0
        %1479 = vmatpush2.bf16.xpose.msra.mxu0 0
        %1480 = vmatprep.subr.bf16.mxu0 0
        %1481 = vmatpush2.bf16.xpose.msra.mxu0 0
        %1482 = vmatprep.subr.bf16.mxu0 0
        %1483 = vmatpush2.bf16.xpose.msra.mxu0 0
        %1484 = vmatprep.subr.bf16.mxu0 0
        %1485 = vmatpush2.bf16.xpose.msra.mxu0 0
        %1486 = vmatprep.subr.bf16.mxu0 0
        %1487 = vmatpush2.bf16.xpose.msra.mxu0 0
        %1488 = vmatprep.subr.bf16.mxu0 0
        %1489 = vmatpush2.bf16.xpose.msra.mxu0 0
        %1490 = vmatprep.subr.bf16.mxu0 0
        %1491 = vmatpush2.bf16.xpose.msra.mxu0 0
        %1492 = vmatprep.mubr.bf16.mxu0 0
        %1493 = vmatmul.mubr.bf16.gmra.mxu0 %v1455
        %v1494 = vpop.f32.mrf.mxu0
        %v1495 = vadd.f32 0.0, %v1494
        %v1496 = vpop.f32.mrf.mxu0
        %v1497 = vpop.f32.mrf.mxu0
        %v1498 = vpop.f32.mrf.mxu0
        %1499 = vdwg.mxu0
        %v1500 = vmul.f32 %v1495, 0.17677669
        %v1501 = vadd.f32 %v1500, %v1272
        %v1502 = vsel %vm1275, %v1501, -inf
        %1503 = vmax.xlane.f32.xlu0 %v1502
        %v1504 = vpop.xlane.xlu0 %1503
        %v1505 = vsub.f32 %v1501, %v1504
        %v1506 = vmul.f32 %v1505, 1.442695
        %v1507 = vpow.pop %v1506
        %v1508 = vsel %vm1275, %v1507, 0.0
        %1509 = vadd.xlane.f32.xlu0 %v1508
        %v1510 = vpop.xlane.xlu0 %1509
        %v1511 = vrcp.pop %v1510
        %v1512 = vmul.f32 %v1507, %v1511
        %v1513 = vpack.c.bf16 %v1512, %v1512
        %1514 = vrot.lane.b32.xlu0 %v1219, 64
        %v1515 = vpop.permute.xlu0 %1514
        %v1517 = vsel %vm1275, %v1513, 0
        %v1520 = vsel %vm1291, %v1515, 0
        %1522 = vmatprep.subr.bf16.mxu0 0
        %1523 = vmatpush1.bf16.msra.mxu0 0
        %1524 = vmatprep.subr.bf16.mxu0 0
        %1525 = vmatpush1.bf16.msra.mxu0 0
        %1526 = vmatprep.subr.bf16.mxu0 0
        %1527 = vmatpush1.bf16.msra.mxu0 0
        %1528 = vmatprep.subr.bf16.mxu0 0
        %1529 = vmatpush1.bf16.msra.mxu0 0
        %1530 = vmatprep.subr.bf16.mxu0 0
        %1531 = vmatpush1.bf16.msra.mxu0 0
        %1532 = vmatprep.subr.bf16.mxu0 0
        %1533 = vmatpush1.bf16.msra.mxu0 0
        %1534 = vmatprep.subr.bf16.mxu0 0
        %1535 = vmatpush1.bf16.msra.mxu0 0
        %1536 = vmatprep.subr.bf16.mxu0 0
        %1537 = vmatpush1.bf16.msra.mxu0 %v1520
        %1538 = vmatprep.subr.bf16.mxu0 0
        %1539 = vmatpush2.bf16.msra.mxu0 0
        %1540 = vmatprep.subr.bf16.mxu0 0
        %1541 = vmatpush2.bf16.msra.mxu0 0
        %1542 = vmatprep.subr.bf16.mxu0 0
        %1543 = vmatpush2.bf16.msra.mxu0 0
        %1544 = vmatprep.subr.bf16.mxu0 0
        %1545 = vmatpush2.bf16.msra.mxu0 0
        %1546 = vmatprep.subr.bf16.mxu0 0
        %1547 = vmatpush2.bf16.msra.mxu0 0
        %1548 = vmatprep.subr.bf16.mxu0 0
        %1549 = vmatpush2.bf16.msra.mxu0 0
        %1550 = vmatprep.subr.bf16.mxu0 0
        %1551 = vmatpush2.bf16.msra.mxu0 0
        %1552 = vmatprep.subr.bf16.mxu0 0
        %1553 = vmatpush2.bf16.msra.mxu0 0
        %1554 = vmatprep.mubr.bf16.mxu0 0
        %1555 = vmatmul.mubr.bf16.gmra.mxu0 %v1517
        %v1556 = vpop.f32.mrf.mxu0
        %v1557 = vadd.f32 0.0, %v1556
        %v1558 = vpop.f32.mrf.mxu0
        %v1559 = vpop.f32.mrf.mxu0
        %v1560 = vpop.f32.mrf.mxu0
        %1561 = vdwg.mxu0
        %1562 = vrot.lane.b32.xlu0 %v1217, 32
        %v1563 = vpop.permute.xlu0 %1562
        %1564 = vrot.lane.b32.xlu0 %v1218, 32
        %v1565 = vpop.permute.xlu0 %1564
        %v1567 = vsel %vm1220, %v1563, 0
        %v1570 = vsel %vm1220, %v1565, 0
        %1572 = vmatprep.subr.bf16.mxu0 0
        %1573 = vmatpush1.bf16.xpose.msra.mxu0 0
        %1574 = vmatprep.subr.bf16.mxu0 0
        %1575 = vmatpush1.bf16.xpose.msra.mxu0 0
        %1576 = vmatprep.subr.bf16.mxu0 0
        %1577 = vmatpush1.bf16.xpose.msra.mxu0 0
        %1578 = vmatprep.subr.bf16.mxu0 0
        %1579 = vmatpush1.bf16.xpose.msra.mxu0 0
        %1580 = vmatprep.subr.bf16.mxu0 0
        %1581 = vmatpush1.bf16.xpose.msra.mxu0 0
        %1582 = vmatprep.subr.bf16.mxu0 0
        %1583 = vmatpush1.bf16.xpose.msra.mxu0 0
        %1584 = vmatprep.subr.bf16.mxu0 0
        %1585 = vmatpush1.bf16.xpose.msra.mxu0 0
        %1586 = vmatprep.subr.bf16.mxu0 0
        %1587 = vmatpush1.bf16.xpose.msra.mxu0 %v1570
        %1588 = vmatprep.subr.bf16.mxu0 0
        %1589 = vmatpush2.bf16.xpose.msra.mxu0 0
        %1590 = vmatprep.subr.bf16.mxu0 0
        %1591 = vmatpush2.bf16.xpose.msra.mxu0 0
        %1592 = vmatprep.subr.bf16.mxu0 0
        %1593 = vmatpush2.bf16.xpose.msra.mxu0 0
        %1594 = vmatprep.subr.bf16.mxu0 0
        %1595 = vmatpush2.bf16.xpose.msra.mxu0 0
        %1596 = vmatprep.subr.bf16.mxu0 0
        %1597 = vmatpush2.bf16.xpose.msra.mxu0 0
        %1598 = vmatprep.subr.bf16.mxu0 0
        %1599 = vmatpush2.bf16.xpose.msra.mxu0 0
        %1600 = vmatprep.subr.bf16.mxu0 0
        %1601 = vmatpush2.bf16.xpose.msra.mxu0 0
        %1602 = vmatprep.subr.bf16.mxu0 0
        %1603 = vmatpush2.bf16.xpose.msra.mxu0 0
        %1604 = vmatprep.mubr.bf16.mxu0 0
        %1605 = vmatmul.mubr.bf16.gmra.mxu0 %v1567
        %v1606 = vpop.f32.mrf.mxu0
        %v1607 = vadd.f32 0.0, %v1606
        %v1608 = vpop.f32.mrf.mxu0
        %v1609 = vpop.f32.mrf.mxu0
        %v1610 = vpop.f32.mrf.mxu0
        %1611 = vdwg.mxu0
        %v1612 = vmul.f32 %v1607, 0.17677669
        %v1613 = vadd.f32 %v1612, %v1272
        %v1614 = vsel %vm1275, %v1613, -inf
        %1615 = vmax.xlane.f32.xlu0 %v1614
        %v1616 = vpop.xlane.xlu0 %1615
        %v1617 = vsub.f32 %v1613, %v1616
        %v1618 = vmul.f32 %v1617, 1.442695
        %v1619 = vpow.pop %v1618
        %v1620 = vsel %vm1275, %v1619, 0.0
        %1621 = vadd.xlane.f32.xlu0 %v1620
        %v1622 = vpop.xlane.xlu0 %1621
        %v1623 = vrcp.pop %v1622
        %v1624 = vmul.f32 %v1619, %v1623
        %v1625 = vpack.c.bf16 %v1624, %v1624
        %1626 = vrot.lane.b32.xlu0 %v1219, 32
        %v1627 = vpop.permute.xlu0 %1626
        %v1629 = vsel %vm1275, %v1625, 0
        %v1632 = vsel %vm1291, %v1627, 0
        %1634 = vmatprep.subr.bf16.mxu0 0
        %1635 = vmatpush1.bf16.msra.mxu0 0
        %1636 = vmatprep.subr.bf16.mxu0 0
        %1637 = vmatpush1.bf16.msra.mxu0 0
        %1638 = vmatprep.subr.bf16.mxu0 0
        %1639 = vmatpush1.bf16.msra.mxu0 0
        %1640 = vmatprep.subr.bf16.mxu0 0
        %1641 = vmatpush1.bf16.msra.mxu0 0
        %1642 = vmatprep.subr.bf16.mxu0 0
        %1643 = vmatpush1.bf16.msra.mxu0 0
        %1644 = vmatprep.subr.bf16.mxu0 0
        %1645 = vmatpush1.bf16.msra.mxu0 0
        %1646 = vmatprep.subr.bf16.mxu0 0
        %1647 = vmatpush1.bf16.msra.mxu0 0
        %1648 = vmatprep.subr.bf16.mxu0 0
        %1649 = vmatpush1.bf16.msra.mxu0 %v1632
        %1650 = vmatprep.subr.bf16.mxu0 0
        %1651 = vmatpush2.bf16.msra.mxu0 0
        %1652 = vmatprep.subr.bf16.mxu0 0
        %1653 = vmatpush2.bf16.msra.mxu0 0
        %1654 = vmatprep.subr.bf16.mxu0 0
        %1655 = vmatpush2.bf16.msra.mxu0 0
        %1656 = vmatprep.subr.bf16.mxu0 0
        %1657 = vmatpush2.bf16.msra.mxu0 0
        %1658 = vmatprep.subr.bf16.mxu0 0
        %1659 = vmatpush2.bf16.msra.mxu0 0
        %1660 = vmatprep.subr.bf16.mxu0 0
        %1661 = vmatpush2.bf16.msra.mxu0 0
        %1662 = vmatprep.subr.bf16.mxu0 0
        %1663 = vmatpush2.bf16.msra.mxu0 0
        %1664 = vmatprep.subr.bf16.mxu0 0
        %1665 = vmatpush2.bf16.msra.mxu0 0
        %1666 = vmatprep.mubr.bf16.mxu0 0
        %1667 = vmatmul.mubr.bf16.gmra.mxu0 %v1629
        %v1668 = vpop.f32.mrf.mxu0
        %v1669 = vadd.f32 0.0, %v1668
        %v1670 = vpop.f32.mrf.mxu0
        %v1671 = vpop.f32.mrf.mxu0
        %v1672 = vpop.f32.mrf.mxu0
        %1673 = vdwg.mxu0
        %1675 = vrot.lane.b32.xlu0 %v1445, 32
        %v1676 = vpop.permute.xlu0 %1675
        %1679 = vrot.lane.b32.xlu0 %v1557, 64
        %v1680 = vpop.permute.xlu0 %1679
        %1683 = vrot.lane.b32.xlu0 %v1669, 96
        %v1684 = vpop.permute.xlu0 %1683
        %v1686 = vsel %vm1220, %v1330, %v1676
        %vm1687 = vcmask 523264
        %v1688 = vsel %vm1687, %v1686, %v1680
        %vm1689 = vcmask 785408
        %v1690 = vsel %vm1689, %v1688, %v1684
        %v1691 = vpack.c.bf16 %v1690, %v1690
        %v1692 = vld [vmem:[%s894] sm:$0xf]
        %v1693 = vld [vmem:[%s894 + $0x4] sm:$0xf]
        %v1694 = vld [vmem:[%s894 + $0x8] sm:$0xf]
        %v1695 = vld [vmem:[%s894 + $0xc] sm:$0xf]
        %v1696 = vld [vmem:[%s894 + $0x10] sm:$0xf]
        %v1697 = vld [vmem:[%s894 + $0x14] sm:$0xf]
        %v1698 = vld [vmem:[%s894 + $0x18] sm:$0xf]
        %v1699 = vld [vmem:[%s894 + $0x1c] sm:$0xf]
        %v1700 = vld [vmem:[%s894 + $0x20] sm:$0xf]
        %v1701 = vld [vmem:[%s894 + $0x24] sm:$0xf]
        %v1702 = vld [vmem:[%s894 + $0x28] sm:$0xf]
        %v1703 = vld [vmem:[%s894 + $0x2c] sm:$0xf]
        %v1704 = vld [vmem:[%s894 + $0x30] sm:$0xf]
        %v1705 = vld [vmem:[%s894 + $0x34] sm:$0xf]
        %v1706 = vld [vmem:[%s894 + $0x38] sm:$0xf]
        %v1707 = vld [vmem:[%s894 + $0x3c] sm:$0xf]
        %v1708 = vld [vmem:[%s897] sm:$0x1]
        %v1710 = vlaneseq
        %v1711 = vshrl.u32 %v1710, 7
        %v1712 = vsub.s32 0, %v1711
        %v1713 = vrot.slane %v1708, %v1712
        %v1731 = vunpack.c.l.b16 %v1692
        %v1732 = vunpack.c.l.b16 %v1693
        %v1733 = vunpack.c.l.b16 %v1694
        %v1734 = vunpack.c.l.b16 %v1695
        %v1735 = vunpack.c.l.b16 %v1696
        %v1736 = vunpack.c.l.b16 %v1697
        %v1737 = vunpack.c.l.b16 %v1698
        %v1738 = vunpack.c.l.b16 %v1699
        %v1739 = vunpack.c.l.b16 %v1700
        %v1740 = vunpack.c.l.b16 %v1701
        %v1741 = vunpack.c.l.b16 %v1702
        %v1742 = vunpack.c.l.b16 %v1703
        %v1743 = vunpack.c.l.b16 %v1704
        %v1744 = vunpack.c.l.b16 %v1705
        %v1745 = vunpack.c.l.b16 %v1706
        %v1746 = vunpack.c.l.b16 %v1707
        %v1747 = vpack.c.b16 %v1732, %v1731
        %v1748 = vpack.c.b16 %v1734, %v1733
        %v1749 = vpack.c.b16 %v1736, %v1735
        %v1750 = vpack.c.b16 %v1738, %v1737
        %v1751 = vpack.c.b16 %v1740, %v1739
        %v1752 = vpack.c.b16 %v1742, %v1741
        %v1753 = vpack.c.b16 %v1744, %v1743
        %v1754 = vpack.c.b16 %v1746, %v1745
        %1763 = vmatprep.subr.bf16.mxu0 0
        %1764 = vmatpush1.bf16.msra.mxu0 %v1754
        %1765 = vmatprep.subr.bf16.mxu0 0
        %1766 = vmatpush1.bf16.msra.mxu0 %v1753
        %1767 = vmatprep.subr.bf16.mxu0 0
        %1768 = vmatpush1.bf16.msra.mxu0 %v1752
        %1769 = vmatprep.subr.bf16.mxu0 0
        %1770 = vmatpush1.bf16.msra.mxu0 %v1751
        %1771 = vmatprep.subr.bf16.mxu0 0
        %1772 = vmatpush1.bf16.msra.mxu0 %v1750
        %1773 = vmatprep.subr.bf16.mxu0 0
        %1774 = vmatpush1.bf16.msra.mxu0 %v1749
        %1775 = vmatprep.subr.bf16.mxu0 0
        %1776 = vmatpush1.bf16.msra.mxu0 %v1748
        %1777 = vmatprep.subr.bf16.mxu0 0
        %1778 = vmatpush1.bf16.msra.mxu0 %v1747
        %1779 = vmatprep.subr.bf16.mxu0 0
        %1780 = vmatpush2.bf16.msra.mxu0 0
        %1781 = vmatprep.subr.bf16.mxu0 0
        %1782 = vmatpush2.bf16.msra.mxu0 0
        %1783 = vmatprep.subr.bf16.mxu0 0
        %1784 = vmatpush2.bf16.msra.mxu0 0
        %1785 = vmatprep.subr.bf16.mxu0 0
        %1786 = vmatpush2.bf16.msra.mxu0 0
        %1787 = vmatprep.subr.bf16.mxu0 0
        %1788 = vmatpush2.bf16.msra.mxu0 0
        %1789 = vmatprep.subr.bf16.mxu0 0
        %1790 = vmatpush2.bf16.msra.mxu0 0
        %1791 = vmatprep.subr.bf16.mxu0 0
        %1792 = vmatpush2.bf16.msra.mxu0 0
        %1793 = vmatprep.subr.bf16.mxu0 0
        %1794 = vmatpush2.bf16.msra.mxu0 0
        %1795 = vmatprep.mubr.bf16.mxu0 0
        %1796 = vmatmul.mubr.bf16.gmra.mxu0 %v1691
        %v1797 = vpop.f32.mrf.mxu0
        %v1798 = vadd.f32 %v1713, %v1797
        %v1799 = vpop.f32.mrf.mxu0
        %v1800 = vpop.f32.mrf.mxu0
        %v1801 = vpop.f32.mrf.mxu0
        %1802 = vdwg.mxu0
        %v1803 = vadd.f32 %v1798, %v956
        %v1804 = vld [vmem:[%s900] sm:$0x1]
        %v1805 = vld [vmem:[%s903] sm:$0x1]
        %1806 = vadd.xlane.f32.xlu0 %v1803
        %v1807 = vpop.xlane.xlu0 %1806
        %v1808 = vrcp.pop 128.0
        %v1809 = vmul.f32 %v1807, %v1808
        %v1810 = vsub.f32 %v1803, %v1809
        %v1811 = vmul.f32 %v1810, %v1810
        %1812 = vadd.xlane.f32.xlu0 %v1811
        %v1813 = vpop.xlane.xlu0 %1812
        %v1814 = vmul.f32 %v1813, %v1808
        %v1815 = vadd.f32 %v1814, 1e-12
        %v1816 = vrsqrt.pop %v1815
        %v1817 = vmul.f32 %v1810, %v1816
        %v1819 = vlaneseq
        %v1820 = vshrl.u32 %v1819, 7
        %v1821 = vsub.s32 0, %v1820
        %v1822 = vrot.slane %v1804, %v1821
        %v1824 = vmul.f32 %v1817, %v1822
        %v1826 = vlaneseq
        %v1827 = vshrl.u32 %v1826, 7
        %v1828 = vsub.s32 0, %v1827
        %v1829 = vrot.slane %v1805, %v1828
        %v1831 = vadd.f32 %v1824, %v1829
        %v1832 = vpack.c.bf16 %v1831, %v1831
        %v1833 = vld [vmem:[%s762] sm:$0xff]
        %v1834 = vld [vmem:[%s762 + $0x8] sm:$0xff]
        %v1835 = vld [vmem:[%s762 + $0x10] sm:$0xff]
        %v1836 = vld [vmem:[%s762 + $0x18] sm:$0xff]
        %v1837 = vld [vmem:[%s762 + $0x20] sm:$0xff]
        %v1838 = vld [vmem:[%s762 + $0x28] sm:$0xff]
        %v1839 = vld [vmem:[%s762 + $0x30] sm:$0xff]
        %v1840 = vld [vmem:[%s762 + $0x38] sm:$0xff]
        %v1841 = vld [vmem:[%s762 + $0x40] sm:$0xff]
        %v1842 = vld [vmem:[%s762 + $0x48] sm:$0xff]
        %v1843 = vld [vmem:[%s762 + $0x50] sm:$0xff]
        %v1844 = vld [vmem:[%s762 + $0x58] sm:$0xff]
        %v1845 = vld [vmem:[%s762 + $0x60] sm:$0xff]
        %v1846 = vld [vmem:[%s762 + $0x68] sm:$0xff]
        %v1847 = vld [vmem:[%s762 + $0x70] sm:$0xff]
        %v1848 = vld [vmem:[%s762 + $0x78] sm:$0xff]
        %v1849 = vld [vmem:[%s907] sm:$0x3]
        %v1851 = vlaneseq
        %v1852 = vshrl.u32 %v1851, 7
        %v1853 = vsub.s32 0, %v1852
        %v1854 = vrot.slane %v1849, %v1853
        %v1855 = vlaneseq
        %v1856 = vshrl.u32 %v1855, 7
        %v1857 = vsub.s32 1, %v1856
        %v1858 = vrot.slane %v1849, %v1857
        %v1877 = vunpack.c.l.b16 %v1833
        %v1878 = vunpack.c.h.b16 %v1833
        %v1879 = vunpack.c.l.b16 %v1834
        %v1880 = vunpack.c.h.b16 %v1834
        %v1881 = vunpack.c.l.b16 %v1835
        %v1882 = vunpack.c.h.b16 %v1835
        %v1883 = vunpack.c.l.b16 %v1836
        %v1884 = vunpack.c.h.b16 %v1836
        %v1885 = vunpack.c.l.b16 %v1837
        %v1886 = vunpack.c.h.b16 %v1837
        %v1887 = vunpack.c.l.b16 %v1838
        %v1888 = vunpack.c.h.b16 %v1838
        %v1889 = vunpack.c.l.b16 %v1839
        %v1890 = vunpack.c.h.b16 %v1839
        %v1891 = vunpack.c.l.b16 %v1840
        %v1892 = vunpack.c.h.b16 %v1840
        %v1893 = vunpack.c.l.b16 %v1841
        %v1894 = vunpack.c.h.b16 %v1841
        %v1895 = vunpack.c.l.b16 %v1842
        %v1896 = vunpack.c.h.b16 %v1842
        %v1897 = vunpack.c.l.b16 %v1843
        %v1898 = vunpack.c.h.b16 %v1843
        %v1899 = vunpack.c.l.b16 %v1844
        %v1900 = vunpack.c.h.b16 %v1844
        %v1901 = vunpack.c.l.b16 %v1845
        %v1902 = vunpack.c.h.b16 %v1845
        %v1903 = vunpack.c.l.b16 %v1846
        %v1904 = vunpack.c.h.b16 %v1846
        %v1905 = vunpack.c.l.b16 %v1847
        %v1906 = vunpack.c.h.b16 %v1847
        %v1907 = vunpack.c.l.b16 %v1848
        %v1908 = vunpack.c.h.b16 %v1848
        %v1909 = vpack.c.b16 %v1879, %v1877
        %v1910 = vpack.c.b16 %v1880, %v1878
        %v1911 = vpack.c.b16 %v1883, %v1881
        %v1912 = vpack.c.b16 %v1884, %v1882
        %v1913 = vpack.c.b16 %v1887, %v1885
        %v1914 = vpack.c.b16 %v1888, %v1886
        %v1915 = vpack.c.b16 %v1891, %v1889
        %v1916 = vpack.c.b16 %v1892, %v1890
        %v1917 = vpack.c.b16 %v1895, %v1893
        %v1918 = vpack.c.b16 %v1896, %v1894
        %v1919 = vpack.c.b16 %v1899, %v1897
        %v1920 = vpack.c.b16 %v1900, %v1898
        %v1921 = vpack.c.b16 %v1903, %v1901
        %v1922 = vpack.c.b16 %v1904, %v1902
        %v1923 = vpack.c.b16 %v1907, %v1905
        %v1924 = vpack.c.b16 %v1908, %v1906
        %1941 = vmatprep.subr.bf16.mxu0 %v1924
        %1942 = vmatpush1.bf16.msra.mxu0 %v1923
        %1943 = vmatprep.subr.bf16.mxu0 %v1922
        %1944 = vmatpush1.bf16.msra.mxu0 %v1921
        %1945 = vmatprep.subr.bf16.mxu0 %v1920
        %1946 = vmatpush1.bf16.msra.mxu0 %v1919
        %1947 = vmatprep.subr.bf16.mxu0 %v1918
        %1948 = vmatpush1.bf16.msra.mxu0 %v1917
        %1949 = vmatprep.subr.bf16.mxu0 %v1916
        %1950 = vmatpush1.bf16.msra.mxu0 %v1915
        %1951 = vmatprep.subr.bf16.mxu0 %v1914
        %1952 = vmatpush1.bf16.msra.mxu0 %v1913
        %1953 = vmatprep.subr.bf16.mxu0 %v1912
        %1954 = vmatpush1.bf16.msra.mxu0 %v1911
        %1955 = vmatprep.subr.bf16.mxu0 %v1910
        %1956 = vmatpush1.bf16.msra.mxu0 %v1909
        %1957 = vmatprep.subr.bf16.mxu0 0
        %1958 = vmatpush2.bf16.msra.mxu0 0
        %1959 = vmatprep.subr.bf16.mxu0 0
        %1960 = vmatpush2.bf16.msra.mxu0 0
        %1961 = vmatprep.subr.bf16.mxu0 0
        %1962 = vmatpush2.bf16.msra.mxu0 0
        %1963 = vmatprep.subr.bf16.mxu0 0
        %1964 = vmatpush2.bf16.msra.mxu0 0
        %1965 = vmatprep.subr.bf16.mxu0 0
        %1966 = vmatpush2.bf16.msra.mxu0 0
        %1967 = vmatprep.subr.bf16.mxu0 0
        %1968 = vmatpush2.bf16.msra.mxu0 0
        %1969 = vmatprep.subr.bf16.mxu0 0
        %1970 = vmatpush2.bf16.msra.mxu0 0
        %1971 = vmatprep.subr.bf16.mxu0 0
        %1972 = vmatpush2.bf16.msra.mxu0 0
        %1973 = vmatprep.mubr.bf16.mxu0 0
        %1974 = vmatmul.mubr.bf16.gmra.mxu0 %v1832
        %v1975 = vpop.f32.mrf.mxu0
        %v1976 = vadd.f32 %v1854, %v1975
        %v1977 = vpop.f32.mrf.mxu0
        %v1978 = vadd.f32 %v1858, %v1977
        %v1979 = vpop.f32.mrf.mxu0
        %v1980 = vpop.f32.mrf.mxu0
        %1981 = vdwg.mxu0
        %v1982 = vmul.f32 %v1976, 0.5
        %v1983 = vmul.f32 %v1978, 0.5
        %v1984 = vmul.f32 %v1976, 0.044715
        %v1985 = vmul.f32 %v1978, 0.044715
        %v1986 = vmul.f32 %v1984, %v1976
        %v1987 = vmul.f32 %v1985, %v1978
        %v1988 = vmul.f32 %v1986, %v1976
        %v1989 = vmul.f32 %v1987, %v1978
        %v1990 = vadd.f32 %v1976, %v1988
        %v1991 = vadd.f32 %v1978, %v1989
        %v1992 = vmul.f32 %v1990, 0.7978846
        %v1993 = vmul.f32 %v1991, 0.7978846
        %v1994 = vtanh.pop %v1992
        %v1995 = vtanh.pop %v1993
        %v1996 = vadd.f32 %v1994, 1.0
        %v1997 = vadd.f32 %v1995, 1.0
        %v1998 = vmul.f32 %v1982, %v1996
        %v1999 = vmul.f32 %v1983, %v1997
        %v2000 = vpack.c.bf16 %v1998, %v1998
        %v2001 = vpack.c.bf16 %v1999, %v1999
        %v2002 = vld [vmem:[%s771] sm:$0xf]
        %v2003 = vld [vmem:[%s771 + $0x4] sm:$0xf]
        %v2004 = vld [vmem:[%s771 + $0x8] sm:$0xf]
        %v2005 = vld [vmem:[%s771 + $0xc] sm:$0xf]
        %v2006 = vld [vmem:[%s771 + $0x10] sm:$0xf]
        %v2007 = vld [vmem:[%s771 + $0x14] sm:$0xf]
        %v2008 = vld [vmem:[%s771 + $0x18] sm:$0xf]
        %v2009 = vld [vmem:[%s771 + $0x1c] sm:$0xf]
        %v2010 = vld [vmem:[%s771 + $0x20] sm:$0xf]
        %v2011 = vld [vmem:[%s771 + $0x24] sm:$0xf]
        %v2012 = vld [vmem:[%s771 + $0x28] sm:$0xf]
        %v2013 = vld [vmem:[%s771 + $0x2c] sm:$0xf]
        %v2014 = vld [vmem:[%s771 + $0x30] sm:$0xf]
        %v2015 = vld [vmem:[%s771 + $0x34] sm:$0xf]
        %v2016 = vld [vmem:[%s771 + $0x38] sm:$0xf]
        %v2017 = vld [vmem:[%s771 + $0x3c] sm:$0xf]
        %v2018 = vld [vmem:[%s771 + $0x40] sm:$0xf]
        %v2019 = vld [vmem:[%s771 + $0x44] sm:$0xf]
        %v2020 = vld [vmem:[%s771 + $0x48] sm:$0xf]
        %v2021 = vld [vmem:[%s771 + $0x4c] sm:$0xf]
        %v2022 = vld [vmem:[%s771 + $0x50] sm:$0xf]
        %v2023 = vld [vmem:[%s771 + $0x54] sm:$0xf]
        %v2024 = vld [vmem:[%s771 + $0x58] sm:$0xf]
        %v2025 = vld [vmem:[%s771 + $0x5c] sm:$0xf]
        %v2026 = vld [vmem:[%s771 + $0x60] sm:$0xf]
        %v2027 = vld [vmem:[%s771 + $0x64] sm:$0xf]
        %v2028 = vld [vmem:[%s771 + $0x68] sm:$0xf]
        %v2029 = vld [vmem:[%s771 + $0x6c] sm:$0xf]
        %v2030 = vld [vmem:[%s771 + $0x70] sm:$0xf]
        %v2031 = vld [vmem:[%s771 + $0x74] sm:$0xf]
        %v2032 = vld [vmem:[%s771 + $0x78] sm:$0xf]
        %v2033 = vld [vmem:[%s771 + $0x7c] sm:$0xf]
        %v2034 = vld [vmem:[%s910] sm:$0x1]
        %v2036 = vlaneseq
        %v2037 = vshrl.u32 %v2036, 7
        %v2038 = vsub.s32 0, %v2037
        %v2039 = vrot.slane %v2034, %v2038
        %v2073 = vunpack.c.l.b16 %v2002
        %v2074 = vunpack.c.l.b16 %v2003
        %v2075 = vunpack.c.l.b16 %v2004
        %v2076 = vunpack.c.l.b16 %v2005
        %v2077 = vunpack.c.l.b16 %v2006
        %v2078 = vunpack.c.l.b16 %v2007
        %v2079 = vunpack.c.l.b16 %v2008
        %v2080 = vunpack.c.l.b16 %v2009
        %v2081 = vunpack.c.l.b16 %v2010
        %v2082 = vunpack.c.l.b16 %v2011
        %v2083 = vunpack.c.l.b16 %v2012
        %v2084 = vunpack.c.l.b16 %v2013
        %v2085 = vunpack.c.l.b16 %v2014
        %v2086 = vunpack.c.l.b16 %v2015
        %v2087 = vunpack.c.l.b16 %v2016
        %v2088 = vunpack.c.l.b16 %v2017
        %v2089 = vunpack.c.l.b16 %v2018
        %v2090 = vunpack.c.l.b16 %v2019
        %v2091 = vunpack.c.l.b16 %v2020
        %v2092 = vunpack.c.l.b16 %v2021
        %v2093 = vunpack.c.l.b16 %v2022
        %v2094 = vunpack.c.l.b16 %v2023
        %v2095 = vunpack.c.l.b16 %v2024
        %v2096 = vunpack.c.l.b16 %v2025
        %v2097 = vunpack.c.l.b16 %v2026
        %v2098 = vunpack.c.l.b16 %v2027
        %v2099 = vunpack.c.l.b16 %v2028
        %v2100 = vunpack.c.l.b16 %v2029
        %v2101 = vunpack.c.l.b16 %v2030
        %v2102 = vunpack.c.l.b16 %v2031
        %v2103 = vunpack.c.l.b16 %v2032
        %v2104 = vunpack.c.l.b16 %v2033
        %v2105 = vpack.c.b16 %v2074, %v2073
        %v2106 = vpack.c.b16 %v2076, %v2075
        %v2107 = vpack.c.b16 %v2078, %v2077
        %v2108 = vpack.c.b16 %v2080, %v2079
        %v2109 = vpack.c.b16 %v2082, %v2081
        %v2110 = vpack.c.b16 %v2084, %v2083
        %v2111 = vpack.c.b16 %v2086, %v2085
        %v2112 = vpack.c.b16 %v2088, %v2087
        %v2113 = vpack.c.b16 %v2090, %v2089
        %v2114 = vpack.c.b16 %v2092, %v2091
        %v2115 = vpack.c.b16 %v2094, %v2093
        %v2116 = vpack.c.b16 %v2096, %v2095
        %v2117 = vpack.c.b16 %v2098, %v2097
        %v2118 = vpack.c.b16 %v2100, %v2099
        %v2119 = vpack.c.b16 %v2102, %v2101
        %v2120 = vpack.c.b16 %v2104, %v2103
        %2137 = vmatprep.subr.bf16.mxu0 0
        %2138 = vmatpush1.bf16.msra.mxu0 %v2112
        %2139 = vmatprep.subr.bf16.mxu0 0
        %2140 = vmatpush1.bf16.msra.mxu0 %v2111
        %2141 = vmatprep.subr.bf16.mxu0 0
        %2142 = vmatpush1.bf16.msra.mxu0 %v2110
        %2143 = vmatprep.subr.bf16.mxu0 0
        %2144 = vmatpush1.bf16.msra.mxu0 %v2109
        %2145 = vmatprep.subr.bf16.mxu0 0
        %2146 = vmatpush1.bf16.msra.mxu0 %v2108
        %2147 = vmatprep.subr.bf16.mxu0 0
        %2148 = vmatpush1.bf16.msra.mxu0 %v2107
        %2149 = vmatprep.subr.bf16.mxu0 0
        %2150 = vmatpush1.bf16.msra.mxu0 %v2106
        %2151 = vmatprep.subr.bf16.mxu0 0
        %2152 = vmatpush1.bf16.msra.mxu0 %v2105
        %2153 = vmatprep.subr.bf16.mxu0 0
        %2154 = vmatpush2.bf16.msra.mxu0 %v2120
        %2155 = vmatprep.subr.bf16.mxu0 0
        %2156 = vmatpush2.bf16.msra.mxu0 %v2119
        %2157 = vmatprep.subr.bf16.mxu0 0
        %2158 = vmatpush2.bf16.msra.mxu0 %v2118
        %2159 = vmatprep.subr.bf16.mxu0 0
        %2160 = vmatpush2.bf16.msra.mxu0 %v2117
        %2161 = vmatprep.subr.bf16.mxu0 0
        %2162 = vmatpush2.bf16.msra.mxu0 %v2116
        %2163 = vmatprep.subr.bf16.mxu0 0
        %2164 = vmatpush2.bf16.msra.mxu0 %v2115
        %2165 = vmatprep.subr.bf16.mxu0 0
        %2166 = vmatpush2.bf16.msra.mxu0 %v2114
        %2167 = vmatprep.subr.bf16.mxu0 0
        %2168 = vmatpush2.bf16.msra.mxu0 %v2113
        %2169 = vmatprep.mubr.bf16.mxu0 %v2001
        %2170 = vmatmul.mubr.bf16.gmra.mxu0 %v2000
        %v2171 = vpop.f32.mrf.mxu0
        %v2172 = vadd.f32 %v2039, %v2171
        %v2173 = vpop.f32.mrf.mxu0
        %v2174 = vpop.f32.mrf.mxu0
        %v2175 = vpop.f32.mrf.mxu0
        %2176 = vdwg.mxu0
        %v2177 = vadd.f32 %v2172, %v1831
        %v2178 = vld [vmem:[%s913] sm:$0x1]
        %v2179 = vld [vmem:[%s916] sm:$0x1]
        %2180 = vadd.xlane.f32.xlu0 %v2177
        %v2181 = vpop.xlane.xlu0 %2180
        %v2182 = vmul.f32 %v2181, %v1808
        %v2183 = vsub.f32 %v2177, %v2182
        %v2184 = vmul.f32 %v2183, %v2183
        %2185 = vadd.xlane.f32.xlu0 %v2184
        %v2186 = vpop.xlane.xlu0 %2185
        %v2187 = vmul.f32 %v2186, %v1808
        %v2188 = vadd.f32 %v2187, 1e-12
        %v2189 = vrsqrt.pop %v2188
        %v2190 = vmul.f32 %v2183, %v2189
        %v2192 = vlaneseq
        %v2193 = vshrl.u32 %v2192, 7
        %v2194 = vsub.s32 0, %v2193
        %v2195 = vrot.slane %v2178, %v2194
        %v2197 = vmul.f32 %v2190, %v2195
        %v2199 = vlaneseq
        %v2200 = vshrl.u32 %v2199, 7
        %v2201 = vsub.s32 0, %v2200
        %v2202 = vrot.slane %v2179, %v2201
        %v2204 = vadd.f32 %v2197, %v2202
        %2205 = vst [vmem:[#allocation2] sm:$0xff] %v2204
        %p2206 = scmp.eq.s32.totalorder %s43, 1
        // Predicated region
        $region121: #{bias_classifier_forward.1} parent=99 // pred_check
          %p2207 = pneg %p2206
        $region122: #{bias_classifier_forward.1} parent=99 // pred_check_branch
          %2209 = sbr.rel (%p2207) target = $region124
        $region123: #{bias_classifier_forward.1} parent=99 // pred_region
          %v2210 = vpack.c.bf16 %v2204, %v2204
          %v2211 = vld [vmem:[%s16] sm:$0xf]
          %v2212 = vld [vmem:[%s16 + $0x4] sm:$0xf]
          %v2213 = vld [vmem:[%s16 + $0x8] sm:$0xf]
          %v2214 = vld [vmem:[%s16 + $0xc] sm:$0xf]
          %v2215 = vld [vmem:[%s16 + $0x10] sm:$0xf]
          %v2216 = vld [vmem:[%s16 + $0x14] sm:$0xf]
          %v2217 = vld [vmem:[%s16 + $0x18] sm:$0xf]
          %v2218 = vld [vmem:[%s16 + $0x1c] sm:$0xf]
          %v2219 = vld [vmem:[%s16 + $0x20] sm:$0xf]
          %v2220 = vld [vmem:[%s16 + $0x24] sm:$0xf]
          %v2221 = vld [vmem:[%s16 + $0x28] sm:$0xf]
          %v2222 = vld [vmem:[%s16 + $0x2c] sm:$0xf]
          %v2223 = vld [vmem:[%s16 + $0x30] sm:$0xf]
          %v2224 = vld [vmem:[%s16 + $0x34] sm:$0xf]
          %v2225 = vld [vmem:[%s16 + $0x38] sm:$0xf]
          %v2226 = vld [vmem:[%s16 + $0x3c] sm:$0xf]
          %v2227 = vld [vmem:[%s17] sm:$0x1]
          %v2244 = vunpack.c.l.b16 %v2211
          %v2245 = vunpack.c.l.b16 %v2212
          %v2246 = vunpack.c.l.b16 %v2213
          %v2247 = vunpack.c.l.b16 %v2214
          %v2248 = vunpack.c.l.b16 %v2215
          %v2249 = vunpack.c.l.b16 %v2216
          %v2250 = vunpack.c.l.b16 %v2217
          %v2251 = vunpack.c.l.b16 %v2218
          %v2252 = vunpack.c.l.b16 %v2219
          %v2253 = vunpack.c.l.b16 %v2220
          %v2254 = vunpack.c.l.b16 %v2221
          %v2255 = vunpack.c.l.b16 %v2222
          %v2256 = vunpack.c.l.b16 %v2223
          %v2257 = vunpack.c.l.b16 %v2224
          %v2258 = vunpack.c.l.b16 %v2225
          %v2259 = vunpack.c.l.b16 %v2226
          %v2260 = vpack.c.b16 %v2245, %v2244
          %v2261 = vpack.c.b16 %v2247, %v2246
          %v2262 = vpack.c.b16 %v2249, %v2248
          %v2263 = vpack.c.b16 %v2251, %v2250
          %v2264 = vpack.c.b16 %v2253, %v2252
          %v2265 = vpack.c.b16 %v2255, %v2254
          %v2266 = vpack.c.b16 %v2257, %v2256
          %v2267 = vpack.c.b16 %v2259, %v2258
          %2276 = vmatprep.subr.bf16.mxu0 0
          %2277 = vmatpush1.bf16.msra.mxu0 %v2267
          %2278 = vmatprep.subr.bf16.mxu0 0
          %2279 = vmatpush1.bf16.msra.mxu0 %v2266
          %2280 = vmatprep.subr.bf16.mxu0 0
          %2281 = vmatpush1.bf16.msra.mxu0 %v2265
          %2282 = vmatprep.subr.bf16.mxu0 0
          %2283 = vmatpush1.bf16.msra.mxu0 %v2264
          %2284 = vmatprep.subr.bf16.mxu0 0
          %2285 = vmatpush1.bf16.msra.mxu0 %v2263
          %2286 = vmatprep.subr.bf16.mxu0 0
          %2287 = vmatpush1.bf16.msra.mxu0 %v2262
          %2288 = vmatprep.subr.bf16.mxu0 0
          %2289 = vmatpush1.bf16.msra.mxu0 %v2261
          %2290 = vmatprep.subr.bf16.mxu0 0
          %2291 = vmatpush1.bf16.msra.mxu0 %v2260
          %2292 = vmatprep.subr.bf16.mxu0 0
          %2293 = vmatpush2.bf16.msra.mxu0 0
          %2294 = vmatprep.subr.bf16.mxu0 0
          %2295 = vmatpush2.bf16.msra.mxu0 0
          %2296 = vmatprep.subr.bf16.mxu0 0
          %2297 = vmatpush2.bf16.msra.mxu0 0
          %2298 = vmatprep.subr.bf16.mxu0 0
          %2299 = vmatpush2.bf16.msra.mxu0 0
          %2300 = vmatprep.subr.bf16.mxu0 0
          %2301 = vmatpush2.bf16.msra.mxu0 0
          %2302 = vmatprep.subr.bf16.mxu0 0
          %2303 = vmatpush2.bf16.msra.mxu0 0
          %2304 = vmatprep.subr.bf16.mxu0 0
          %2305 = vmatpush2.bf16.msra.mxu0 0
          %2306 = vmatprep.subr.bf16.mxu0 0
          %2307 = vmatpush2.bf16.msra.mxu0 0
          %2308 = vmatprep.mubr.bf16.mxu0 0
          %2309 = vmatmul.mubr.bf16.gmra.mxu0 %v2210
          %v2310 = vpop.f32.mrf.mxu0
          %v2311 = vadd.f32 %v2227, %v2310
          %v2312 = vpop.f32.mrf.mxu0
          %v2313 = vpop.f32.mrf.mxu0
          %v2314 = vpop.f32.mrf.mxu0
          %2315 = vdwg.mxu0
          %v2316 = vtanh.pop %v2311
          %v2317 = vpack.c.bf16 %v2316, %v2316
          %v2318 = vld [vmem:[#allocation8] sm:$0xf]
          %v2319 = vld [vmem:[#allocation8 + $0x4] sm:$0xf]
          %v2320 = vld [vmem:[#allocation8 + $0x8] sm:$0xf]
          %v2321 = vld [vmem:[#allocation8 + $0xc] sm:$0xf]
          %v2322 = vld [vmem:[#allocation8 + $0x10] sm:$0xf]
          %v2323 = vld [vmem:[#allocation8 + $0x14] sm:$0xf]
          %v2324 = vld [vmem:[#allocation8 + $0x18] sm:$0xf]
          %v2325 = vld [vmem:[#allocation8 + $0x1c] sm:$0xf]
          %v2326 = vld [vmem:[#allocation8 + $0x20] sm:$0xf]
          %v2327 = vld [vmem:[#allocation8 + $0x24] sm:$0xf]
          %v2328 = vld [vmem:[#allocation8 + $0x28] sm:$0xf]
          %v2329 = vld [vmem:[#allocation8 + $0x2c] sm:$0xf]
          %v2330 = vld [vmem:[#allocation8 + $0x30] sm:$0xf]
          %v2331 = vld [vmem:[#allocation8 + $0x34] sm:$0xf]
          %v2332 = vld [vmem:[#allocation8 + $0x38] sm:$0xf]
          %v2333 = vld [vmem:[#allocation8 + $0x3c] sm:$0xf]
          %v2334 = vld [vmem:[%s19] sm:$0x1]
          %v2351 = vunpack.c.l.b16 %v2318
          %v2352 = vunpack.c.l.b16 %v2319
          %v2353 = vunpack.c.l.b16 %v2320
          %v2354 = vunpack.c.l.b16 %v2321
          %v2355 = vunpack.c.l.b16 %v2322
          %v2356 = vunpack.c.l.b16 %v2323
          %v2357 = vunpack.c.l.b16 %v2324
          %v2358 = vunpack.c.l.b16 %v2325
          %v2359 = vunpack.c.l.b16 %v2326
          %v2360 = vunpack.c.l.b16 %v2327
          %v2361 = vunpack.c.l.b16 %v2328
          %v2362 = vunpack.c.l.b16 %v2329
          %v2363 = vunpack.c.l.b16 %v2330
          %v2364 = vunpack.c.l.b16 %v2331
          %v2365 = vunpack.c.l.b16 %v2332
          %v2366 = vunpack.c.l.b16 %v2333
          %v2367 = vpack.c.b16 %v2352, %v2351
          %v2368 = vpack.c.b16 %v2354, %v2353
          %v2369 = vpack.c.b16 %v2356, %v2355
          %v2370 = vpack.c.b16 %v2358, %v2357
          %v2371 = vpack.c.b16 %v2360, %v2359
          %v2372 = vpack.c.b16 %v2362, %v2361
          %v2373 = vpack.c.b16 %v2364, %v2363
          %v2374 = vpack.c.b16 %v2366, %v2365
          %2383 = vmatprep.subr.bf16.mxu0 0
          %2384 = vmatpush1.bf16.msra.mxu0 %v2374
          %2385 = vmatprep.subr.bf16.mxu0 0
          %2386 = vmatpush1.bf16.msra.mxu0 %v2373
          %2387 = vmatprep.subr.bf16.mxu0 0
          %2388 = vmatpush1.bf16.msra.mxu0 %v2372
          %2389 = vmatprep.subr.bf16.mxu0 0
          %2390 = vmatpush1.bf16.msra.mxu0 %v2371
          %2391 = vmatprep.subr.bf16.mxu0 0
          %2392 = vmatpush1.bf16.msra.mxu0 %v2370
          %2393 = vmatprep.subr.bf16.mxu0 0
          %2394 = vmatpush1.bf16.msra.mxu0 %v2369
          %2395 = vmatprep.subr.bf16.mxu0 0
          %2396 = vmatpush1.bf16.msra.mxu0 %v2368
          %2397 = vmatprep.subr.bf16.mxu0 0
          %2398 = vmatpush1.bf16.msra.mxu0 %v2367
          %2399 = vmatprep.subr.bf16.mxu0 0
          %2400 = vmatpush2.bf16.msra.mxu0 0
          %2401 = vmatprep.subr.bf16.mxu0 0
          %2402 = vmatpush2.bf16.msra.mxu0 0
          %2403 = vmatprep.subr.bf16.mxu0 0
          %2404 = vmatpush2.bf16.msra.mxu0 0
          %2405 = vmatprep.subr.bf16.mxu0 0
          %2406 = vmatpush2.bf16.msra.mxu0 0
          %2407 = vmatprep.subr.bf16.mxu0 0
          %2408 = vmatpush2.bf16.msra.mxu0 0
          %2409 = vmatprep.subr.bf16.mxu0 0
          %2410 = vmatpush2.bf16.msra.mxu0 0
          %2411 = vmatprep.subr.bf16.mxu0 0
          %2412 = vmatpush2.bf16.msra.mxu0 0
          %2413 = vmatprep.subr.bf16.mxu0 0
          %2414 = vmatpush2.bf16.msra.mxu0 0
          %2415 = vmatprep.mubr.bf16.mxu0 0
          %2416 = vmatmul.mubr.bf16.gmra.mxu0 %v2317
          %v2417 = vpop.f32.mrf.mxu0
          %v2418 = vadd.f32 %v2334, %v2417
          %v2419 = vpop.f32.mrf.mxu0
          %v2420 = vpop.f32.mrf.mxu0
          %v2421 = vpop.f32.mrf.mxu0
          %2422 = vdwg.mxu0
          %v2423 = vlaneseq
          %v2424 = vshrl.u32 %v2423, 7
          %v2425 = vsub.s32 0, %v2424
          %v2426 = vrot.slane %v2418, %v2425
          %2427 = vst [vmem:[%s920] sm:$0xff] %v2426
        $region124: #{bias_classifier_forward.1} parent=99 // pred_fallthru
          _
        %p2428 = scmp.lt.s32.totalorder %s42, 1
        %s2429 = scalar_select %p2428, %s42, 1
        %s2430 = smul.addr %s2429, 8
        %s2431 = scalar_lea.vmem %s20, %s2430
        // Predicated region
        $region125: #{bias_classifier_forward.1} parent=99 // pred_check
          %p2432 = pneg %p558
        $region126: #{bias_classifier_forward.1} parent=99 // pred_check_branch
          %2434 = sbr.rel (%p2432) target = $region128
        $region127: #{bias_classifier_forward.1} parent=99 // pred_region
          _
        $region128: #{bias_classifier_forward.1} parent=99 // pred_fallthru
          _
      $region100: #{bias_classifier_forward.1} parent=5 // pred_fallthru
        _
      %p2435 = scmp.le.s32.totalorder 2, %s33
      // Predicated region
      $region129: #{bias_classifier_forward.1} parent=5 // pred_check
        %p2436 = pneg %p2435
      $region130: #{bias_classifier_forward.1} parent=5 // pred_check_branch
        %2438 = sbr.rel (%p2436) target = $region132
      $region131: #{bias_classifier_forward.1} parent=5 // pred_region
        %s2439 = ssub.s32 %s33, 2
        // Predicated region
        $region133: #{bias_classifier_forward.1} parent=131 // pred_check
          %p2440 = pneg %p564
        $region134: #{bias_classifier_forward.1} parent=131 // pred_check_branch
          %2442 = sbr.rel (%p2440) target = $region136
        $region135: #{bias_classifier_forward.1} parent=131 // pred_region
          %p2443 = scmp.lt.s32.totalorder %s44, 1
          %s2444 = scalar_select %p2443, %s44, 1
          %s2445 = smul.addr %s2444, 8
          %s2446 = scalar_lea.vmem %s20, %s2445
        $region136: #{bias_classifier_forward.1} parent=131 // pred_fallthru
          _
      $region132: #{bias_classifier_forward.1} parent=5 // pred_fallthru
        _
    $region6: #{bias_classifier_forward.1} parent=1 // loop_footer
      %s37 = sadd.s32 1, %s33
    $region7: #{bias_classifier_forward.1} parent=1 // loop_footer_branch
      %32 = sbr.rel target = $region3
    $region8: #{bias_classifier_forward.1} parent=1 // loop_exit
      _
    %2447 = vsyncpa [#allocation4], 1
    %s2448 = scalar_lea.sflag [#allocation4], 1
    %2449 = vsyncpa %s2448, 1
    %2450 = vsyncpa [#allocation6], 1
    %s2451 = scalar_lea.sflag [#allocation6], 1
    %2452 = vsyncpa %s2451, 1
    %2453 = vsyncpa [#allocation9], 1

</llo_original>
